<compile_context>
chip_gen: v7x
topology: tpu7x:2x2x1
jax: 0.10.0
libtpu: 0.0.40
codegen_flags: <defaults>
</compile_context>

<pallas_src>
import functools
import math

import jax
import jax.numpy as jnp
from jax.experimental import pallas as pl
from jax.experimental.pallas import tpu as pltpu

# ----------------------------- config -------------------------------------
B = 2          # batch
S = 8          # max_seq_len
H = 32         # hidden_size
NH = 4         # num_attention_heads
HD = H // NH   # head_hidden_size
LN_EPS = 1e-12


# ----------------------------- kernel --------------------------------------
def bert_attention_kernel(
    mask_ref,      # [B, S]
    x_ref,         # [B*S, H]        batch folded into rows
    wqkvb_ref,     # [H+1, 3H]       rows 0..H-1: fused pre-transposed Wq*s|Wk|Wv
                   #                 row  H     : fused bias (bq*s|bk|bv)
    wo_obg_ref,    # [H+3, H]        rows 0..H-1: pre-transposed Wo
                   #                 rows H,H+1,H+2: bo, gamma, beta
    out_ref,       # [B*S, H]
    probs_ref,     # [B, NH*S, S]    head-major rows == [B, NH, S, S] memory order
    *, b, s, h, nh,
):
    hd = h // nh
    x = x_ref[...]                                   # [B*S, H] f32
    mask_add = (1.0 - mask_ref[...]) * -10000.0      # [B, S]
    mask_add = mask_add[:, None, :]                  # [B, 1, S] -> bcast over q

    # Fused QKV projection. The 1/sqrt(hd) scale is already folded into the Wq
    # columns / bq at prep time, so no per-head score scaling below.
    # TODO(synk): attention_probs_dropout_prob / hidden_dropout_prob dropout
    # omitted (eval-mode identity).
    w_qkv = wqkvb_ref[0:h, :]                        # [H, 3H]
    b_qkv = wqkvb_ref[h:h + 1, :]                    # [1, 3H]
    qkv = jnp.dot(x, w_qkv, preferred_element_type=jnp.float32) + b_qkv
    qkv = qkv.reshape(b, s, 3 * h)                   # leading-dim split: free

    bo = wo_obg_ref[h:h + 1, :]                      # [1, H]
    gamma = wo_obg_ref[h + 1:h + 2, :]               # [1, H]
    beta = wo_obg_ref[h + 2:h + 3, :]                # [1, H]

    # y accumulates: residual + output bias + sum_h ctx_h @ Wo[head rows]
    y = x + bo                                       # [B*S, H]
    probs_parts = []
    for hh in range(nh):                             # static unroll over heads
        q_h = qkv[:, :, hh * hd:(hh + 1) * hd]                   # [B, S, HD]
        k_h = qkv[:, :, h + hh * hd:h + (hh + 1) * hd]           # [B, S, HD]
        v_h = qkv[:, :, 2 * h + hh * hd:2 * h + (hh + 1) * hd]   # [B, S, HD]

        # Batched over the batch dim; contraction on last dims -> no transpose.
        scores = jnp.einsum("bqd,bkd->bqk", q_h, k_h,
                            preferred_element_type=jnp.float32) + mask_add

        # numerically-stable softmax along the key axis
        m = jnp.max(scores, axis=-1, keepdims=True)
        e = jnp.exp(scores - m)
        denom = jnp.sum(e, axis=-1, keepdims=True)
        # exact reciprocal keeps the 1e-5 probs tolerance (approx=True would
        # run on the idle EUP slot but loosens accuracy).
        p = e * pl.reciprocal(denom, approx=False)               # [B, S, S]
        probs_parts.append(p)

        ctx_h = jnp.einsum("bqk,bkd->bqd", p, v_h,
                           preferred_element_type=jnp.float32)   # [B, S, HD]
        # Fold the head merge into the output projection: accumulate
        # ctx_h @ Wo[hh*hd:(hh+1)*hd, :] instead of lane-concat + big dot.
        y = y + jnp.dot(ctx_h.reshape(b * s, hd),
                        wo_obg_ref[hh * hd:(hh + 1) * hd, :],
                        preferred_element_type=jnp.float32)

    # Single coalesced store; dim-1 is head-major so this IS [B, NH, S, S]
    # memory order and the wrapper reshape is a free leading-dim split.
    probs_ref[...] = jnp.concatenate(probs_parts, axis=1)        # [B, NH*S, S]

    # LayerNorm(dense(out) + residual); y already holds ctx@Wo + bo + x.
    mu = jnp.mean(y, axis=-1, keepdims=True)
    var = jnp.mean((y - mu) ** 2, axis=-1, keepdims=True)
    normed = (y - mu) * jax.lax.rsqrt(var + LN_EPS)
    out_ref[...] = normed * gamma + beta


# ----------------------------- param prep (one-time) -----------------------
def prepare_params(params, num_heads=NH):
    """Fuse / pre-transpose / pre-scale all weights once, outside the hot path."""
    h = params["wq"].shape[0]
    hd = h // num_heads
    scale = 1.0 / math.sqrt(hd)
    # Fold 1/sqrt(hd) into Wq / bq; pre-transpose to [in, out] so the kernel
    # never transposes on-chip.
    wqkv = jnp.concatenate(
        [(params["wq"] * scale).T, params["wk"].T, params["wv"].T], axis=1)  # [H, 3H]
    bqkv = jnp.concatenate(
        [params["bq"] * scale, params["bk"], params["bv"]], axis=1)          # [1, 3H]
    wqkvb = jnp.concatenate([wqkv, bqkv], axis=0)                            # [H+1, 3H]
    wo_obg = jnp.concatenate(
        [params["wo"].T, params["bo"], params["gamma"], params["beta"]],
        axis=0)                                                              # [H+3, H]
    return {"wqkvb": wqkvb, "wo_obg": wo_obg}


# ----------------------------- wrapper --------------------------------------
def _full_spec(shape):
    nd = len(shape)
    return pl.BlockSpec(shape, lambda i, _nd=nd: (0,) * _nd)


@functools.partial(jax.jit, static_argnames=("num_heads",))
def custom_bert_attention(hidden_states, attention_mask, prepared, num_heads=NH):
    b, s, h = hidden_states.shape
    assert h % num_heads == 0, "hidden_size must be divisible by num_heads"
    x2d = hidden_states.reshape(b * s, h)            # fold batch into rows
    mask2d = attention_mask.astype(jnp.float32)      # [B, S]

    kernel = functools.partial(bert_attention_kernel, b=b, s=s, h=h, nh=num_heads)

    out_shapes = (
        jax.ShapeDtypeStruct((b * s, h), jnp.float32),            # attention_output
        jax.ShapeDtypeStruct((b, num_heads * s, s), jnp.float32), # attention_prob
    )

    fn = pl.pallas_call(
        kernel,
        out_shape=out_shapes,
        grid_spec=pltpu.PrefetchScalarGridSpec(
            num_scalar_prefetch=0,
            grid=(1,),                        # batch folded: single grid step
            in_specs=[
                _full_spec((b, s)),           # mask
                _full_spec((b * s, h)),       # hidden_states (flattened)
                _full_spec((h + 1, 3 * h)),   # fused Wqkv + bias (scale folded)
                _full_spec((h + 3, h)),       # Wo^T + bo + gamma + beta
            ],
            out_specs=[
                _full_spec((b * s, h)),
                _full_spec((b, num_heads * s, s)),
            ],
        ),
        compiler_params=pltpu.CompilerParams(
            dimension_semantics=("arbitrary",)),
    )

    out2d, probs3d = fn(mask2d, x2d, prepared["wqkvb"], prepared["wo_obg"])

    # Both reshapes below are leading-dim splits (free / no XLA transpose).
    attention_output = out2d.reshape(b, s, h)
    attention_prob = probs3d.reshape(b, num_heads, s, s)
    return attention_output, attention_prob


# ----------------------------- reference (pure JAX) -------------------------
def reference(hidden_states, attention_mask, p):
    x = hidden_states
    q = x @ p["wq"].T + p["bq"]
    k = x @ p["wk"].T + p["bk"]
    v = x @ p["wv"].T + p["bv"]

    def split(t):
        return t.reshape(B, S, NH, HD).transpose(0, 2, 1, 3)   # [B, NH, S, HD]

    q, k, v = split(q), split(k), split(v)
    scores = jnp.einsum("bhqd,bhkd->bhqk", q, k) / math.sqrt(HD)
    madd = (1.0 - attention_mask)[:, None, None, :] * -10000.0
    scores = scores + madd
    probs = jax.nn.softmax(scores, axis=-1)
    ctx = jnp.einsum("bhqk,bhkd->bhqd", probs, v)
    ctx = ctx.transpose(0, 2, 1, 3).reshape(B, S, H)
    y = ctx @ p["wo"].T + p["bo"] + x
    mu = y.mean(-1, keepdims=True)
    var = ((y - mu) ** 2).mean(-1, keepdims=True)
    out = (y - mu) / jnp.sqrt(var + LN_EPS) * p["gamma"] + p["beta"]
    return out, probs


# ----------------------------- main ------------------------------------------
if __name__ == "__main__":
    key = jax.random.PRNGKey(0)
    keys = jax.random.split(key, 12)

    def uinit(k, shape, fan_in):
        bound = 1.0 / math.sqrt(fan_in)
        return jax.random.uniform(k, shape, jnp.float32, -bound, bound)

    params = {
        "wq": uinit(keys[0], (H, H), H), "bq": uinit(keys[1], (1, H), H),
        "wk": uinit(keys[2], (H, H), H), "bk": uinit(keys[3], (1, H), H),
        "wv": uinit(keys[4], (H, H), H), "bv": uinit(keys[5], (1, H), H),
        "wo": uinit(keys[6], (H, H), H), "bo": uinit(keys[7], (1, H), H),
        "gamma": jnp.ones((1, H), jnp.float32),
        "beta": jnp.zeros((1, H), jnp.float32),
    }

    # One-time parameter preparation (hoisted out of the per-call path).
    prepared = prepare_params(params)
    prepared = jax.tree_util.tree_map(jax.block_until_ready, prepared)

    x = jax.random.normal(keys[8], (B, S, H), jnp.float32)
    # attention mask: keep first few tokens per sequence, mask the rest
    mask = (jnp.arange(S)[None, :] < jnp.array([[S], [S - 3]])).astype(jnp.float32)

    out, probs = custom_bert_attention(x, mask, prepared)
    out = jax.block_until_ready(out)
    probs = jax.block_until_ready(probs)

    ref_out, ref_probs = reference(x, mask, params)
    assert out.shape == (B, S, H) and probs.shape == (B, NH, S, S)
    assert jnp.allclose(out, ref_out, atol=1e-4, rtol=1e-4)
    assert jnp.allclose(probs, ref_probs, atol=1e-5, rtol=1e-5)

    print("KERNEL_OK")
</pallas_src>

<mosaic_0001>
module attributes {stable_mosaic.version = 11 : i64} {
  func.func @bert_attention_kernel(%arg0: i32, %arg1: memref<2x8xf32, #tpu.memory_space<vmem>>, %arg2: memref<16x32xf32, #tpu.memory_space<vmem>>, %arg3: memref<33x96xf32, #tpu.memory_space<vmem>>, %arg4: memref<35x32xf32, #tpu.memory_space<vmem>>, %arg5: memref<16x32xf32, #tpu.memory_space<vmem>>, %arg6: memref<2x32x8xf32, #tpu.memory_space<vmem>>) attributes {dimension_semantics = [#tpu.dimension_semantics<arbitrary>], iteration_bounds = array<i64: 1>, scalar_prefetch = 0 : i64, scratch_operands = 0 : i64, tpu.core_type = #tpu.core_type<tc>, window_params = [{pipeline_mode = #tpu.pipeline_mode<synchronous>, transform_indices = @transform_0, window_bounds = array<i64: 2, 8>}, {pipeline_mode = #tpu.pipeline_mode<synchronous>, transform_indices = @transform_1, window_bounds = array<i64: 16, 32>}, {pipeline_mode = #tpu.pipeline_mode<synchronous>, transform_indices = @transform_2, window_bounds = array<i64: 33, 96>}, {pipeline_mode = #tpu.pipeline_mode<synchronous>, transform_indices = @transform_3, window_bounds = array<i64: 35, 32>}, {pipeline_mode = #tpu.pipeline_mode<synchronous>, transform_indices = @transform_4, window_bounds = array<i64: 16, 32>}, {pipeline_mode = #tpu.pipeline_mode<synchronous>, transform_indices = @transform_5, window_bounds = array<i64: 2, 32, 8>}]} {
    %c0 = arith.constant 0 : index
    %c0_0 = arith.constant 0 : index
    %0 = vector.load %arg2[%c0, %c0_0] : memref<16x32xf32, #tpu.memory_space<vmem>>, vector<16x32xf32>
    %c0_1 = arith.constant 0 : index
    %c0_2 = arith.constant 0 : index
    %1 = vector.load %arg1[%c0_1, %c0_2] : memref<2x8xf32, #tpu.memory_space<vmem>>, vector<2x8xf32>
    %cst = arith.constant 1.000000e+00 : f32
    %2 = vector.broadcast %cst : f32 to vector<2x8xf32>
    %3 = arith.subf %2, %1 : vector<2x8xf32>
    %cst_3 = arith.constant -1.000000e+04 : f32
    %4 = vector.broadcast %cst_3 : f32 to vector<2x8xf32>
    %5 = arith.mulf %3, %4 : vector<2x8xf32>
    %6 = vector.shape_cast %5 : vector<2x8xf32> to vector<2x1x8xf32>
    %c0_4 = arith.constant 0 : index
    %c0_5 = arith.constant 0 : index
    %7 = vector.load %arg3[%c0_4, %c0_5] : memref<33x96xf32, #tpu.memory_space<vmem>>, vector<32x96xf32>
    %c32 = arith.constant 32 : index
    %c0_6 = arith.constant 0 : index
    %8 = vector.load %arg3[%c32, %c0_6] : memref<33x96xf32, #tpu.memory_space<vmem>>, vector<1x96xf32>
    %cst_7 = arith.constant dense<0.000000e+00> : vector<16x96xf32>
    %9 = tpu.matmul %0, %7, %cst_7 {dimension_numbers = #tpu.dot_dimension_numbers<[1], [0], [0], [1], [0, 0, 1, 1], [], []>} : vector<16x32xf32>, vector<32x96xf32>, vector<16x96xf32> -> vector<16x96xf32>
    %10 = vector.broadcast %8 : vector<1x96xf32> to vector<16x96xf32>
    %11 = arith.addf %9, %10 : vector<16x96xf32>
    %12 = vector.shape_cast %11 : vector<16x96xf32> to vector<2x8x96xf32>
    %c32_8 = arith.constant 32 : index
    %c0_9 = arith.constant 0 : index
    %13 = vector.load %arg4[%c32_8, %c0_9] : memref<35x32xf32, #tpu.memory_space<vmem>>, vector<1x32xf32>
    %c33 = arith.constant 33 : index
    %c0_10 = arith.constant 0 : index
    %14 = vector.load %arg4[%c33, %c0_10] : memref<35x32xf32, #tpu.memory_space<vmem>>, vector<1x32xf32>
    %c34 = arith.constant 34 : index
    %c0_11 = arith.constant 0 : index
    %15 = vector.load %arg4[%c34, %c0_11] : memref<35x32xf32, #tpu.memory_space<vmem>>, vector<1x32xf32>
    %16 = vector.broadcast %13 : vector<1x32xf32> to vector<16x32xf32>
    %17 = arith.addf %0, %16 : vector<16x32xf32>
    %18 = vector.extract_strided_slice %12 {offsets = [0, 0, 0], sizes = [2, 8, 8], strides = [1, 1, 1]} : vector<2x8x96xf32> to vector<2x8x8xf32>
    %19 = vector.extract_strided_slice %12 {offsets = [0, 0, 32], sizes = [2, 8, 8], strides = [1, 1, 1]} : vector<2x8x96xf32> to vector<2x8x8xf32>
    %20 = vector.extract_strided_slice %12 {offsets = [0, 0, 64], sizes = [2, 8, 8], strides = [1, 1, 1]} : vector<2x8x96xf32> to vector<2x8x8xf32>
    "tpu.trace_start"() <{level = 10 : i32, message = "bqd,bkd->bqk"}> : () -> ()
    %cst_12 = arith.constant dense<0.000000e+00> : vector<2x8x8xf32>
    %21 = tpu.matmul %18, %19, %cst_12 {dimension_numbers = #tpu.dot_dimension_numbers<[2], [2], [1], [1], [0, 0, 0, 1, 1, 1], [0], [0]>} : vector<2x8x8xf32>, vector<2x8x8xf32>, vector<2x8x8xf32> -> vector<2x8x8xf32>
    "tpu.trace_stop"() : () -> ()
    %22 = vector.broadcast %6 : vector<2x1x8xf32> to vector<2x8x8xf32>
    %23 = arith.addf %21, %22 : vector<2x8x8xf32>
    %cst_13 = arith.constant dense<0xFF800000> : vector<2x8xf32>
    %24 = vector.multi_reduction <maximumf>, %23, %cst_13 [2] : vector<2x8x8xf32> to vector<2x8xf32>
    %25 = vector.shape_cast %24 : vector<2x8xf32> to vector<2x8x1xf32>
    %26 = vector.broadcast %25 : vector<2x8x1xf32> to vector<2x8x8xf32>
    %27 = arith.subf %23, %26 : vector<2x8x8xf32>
    %28 = math.exp %27 : vector<2x8x8xf32>
    %cst_14 = arith.constant dense<0.000000e+00> : vector<2x8xf32>
    %29 = vector.multi_reduction <add>, %28, %cst_14 [2] : vector<2x8x8xf32> to vector<2x8xf32>
    %30 = vector.shape_cast %29 : vector<2x8xf32> to vector<2x8x1xf32>
    %31 = tpu.reciprocal %30 : vector<2x8x1xf32> -> vector<2x8x1xf32>
    %32 = vector.broadcast %31 : vector<2x8x1xf32> to vector<2x8x8xf32>
    %33 = arith.mulf %28, %32 : vector<2x8x8xf32>
    "tpu.trace_start"() <{level = 10 : i32, message = "bqk,bkd->bqd"}> : () -> ()
    %cst_15 = arith.constant dense<0.000000e+00> : vector<2x8x8xf32>
    %34 = tpu.matmul %33, %20, %cst_15 {dimension_numbers = #tpu.dot_dimension_numbers<[2], [1], [1], [2], [0, 0, 0, 1, 1, 2], [0], [0]>} : vector<2x8x8xf32>, vector<2x8x8xf32>, vector<2x8x8xf32> -> vector<2x8x8xf32>
    "tpu.trace_stop"() : () -> ()
    %35 = vector.shape_cast %34 : vector<2x8x8xf32> to vector<16x8xf32>
    %c0_16 = arith.constant 0 : index
    %c0_17 = arith.constant 0 : index
    %36 = vector.load %arg4[%c0_16, %c0_17] : memref<35x32xf32, #tpu.memory_space<vmem>>, vector<8x32xf32>
    %cst_18 = arith.constant dense<0.000000e+00> : vector<16x32xf32>
    %37 = tpu.matmul %35, %36, %cst_18 {dimension_numbers = #tpu.dot_dimension_numbers<[1], [0], [0], [1], [0, 0, 1, 1], [], []>} : vector<16x8xf32>, vector<8x32xf32>, vector<16x32xf32> -> vector<16x32xf32>
    %38 = arith.addf %17, %37 : vector<16x32xf32>
    %39 = vector.extract_strided_slice %12 {offsets = [0, 0, 8], sizes = [2, 8, 8], strides = [1, 1, 1]} : vector<2x8x96xf32> to vector<2x8x8xf32>
    %40 = vector.extract_strided_slice %12 {offsets = [0, 0, 40], sizes = [2, 8, 8], strides = [1, 1, 1]} : vector<2x8x96xf32> to vector<2x8x8xf32>
    %41 = vector.extract_strided_slice %12 {offsets = [0, 0, 72], sizes = [2, 8, 8], strides = [1, 1, 1]} : vector<2x8x96xf32> to vector<2x8x8xf32>
    "tpu.trace_start"() <{level = 10 : i32, message = "bqd,bkd->bqk"}> : () -> ()
    %cst_19 = arith.constant dense<0.000000e+00> : vector<2x8x8xf32>
    %42 = tpu.matmul %39, %40, %cst_19 {dimension_numbers = #tpu.dot_dimension_numbers<[2], [2], [1], [1], [0, 0, 0, 1, 1, 1], [0], [0]>} : vector<2x8x8xf32>, vector<2x8x8xf32>, vector<2x8x8xf32> -> vector<2x8x8xf32>
    "tpu.trace_stop"() : () -> ()
    %43 = vector.broadcast %6 : vector<2x1x8xf32> to vector<2x8x8xf32>
    %44 = arith.addf %42, %43 : vector<2x8x8xf32>
    %cst_20 = arith.constant dense<0xFF800000> : vector<2x8xf32>
    %45 = vector.multi_reduction <maximumf>, %44, %cst_20 [2] : vector<2x8x8xf32> to vector<2x8xf32>
    %46 = vector.shape_cast %45 : vector<2x8xf32> to vector<2x8x1xf32>
    %47 = vector.broadcast %46 : vector<2x8x1xf32> to vector<2x8x8xf32>
    %48 = arith.subf %44, %47 : vector<2x8x8xf32>
    %49 = math.exp %48 : vector<2x8x8xf32>
    %cst_21 = arith.constant dense<0.000000e+00> : vector<2x8xf32>
    %50 = vector.multi_reduction <add>, %49, %cst_21 [2] : vector<2x8x8xf32> to vector<2x8xf32>
    %51 = vector.shape_cast %50 : vector<2x8xf32> to vector<2x8x1xf32>
    %52 = tpu.reciprocal %51 : vector<2x8x1xf32> -> vector<2x8x1xf32>
    %53 = vector.broadcast %52 : vector<2x8x1xf32> to vector<2x8x8xf32>
    %54 = arith.mulf %49, %53 : vector<2x8x8xf32>
    "tpu.trace_start"() <{level = 10 : i32, message = "bqk,bkd->bqd"}> : () -> ()
    %cst_22 = arith.constant dense<0.000000e+00> : vector<2x8x8xf32>
    %55 = tpu.matmul %54, %41, %cst_22 {dimension_numbers = #tpu.dot_dimension_numbers<[2], [1], [1], [2], [0, 0, 0, 1, 1, 2], [0], [0]>} : vector<2x8x8xf32>, vector<2x8x8xf32>, vector<2x8x8xf32> -> vector<2x8x8xf32>
    "tpu.trace_stop"() : () -> ()
    %56 = vector.shape_cast %55 : vector<2x8x8xf32> to vector<16x8xf32>
    %c8 = arith.constant 8 : index
    %c0_23 = arith.constant 0 : index
    %57 = vector.load %arg4[%c8, %c0_23] : memref<35x32xf32, #tpu.memory_space<vmem>>, vector<8x32xf32>
    %cst_24 = arith.constant dense<0.000000e+00> : vector<16x32xf32>
    %58 = tpu.matmul %56, %57, %cst_24 {dimension_numbers = #tpu.dot_dimension_numbers<[1], [0], [0], [1], [0, 0, 1, 1], [], []>} : vector<16x8xf32>, vector<8x32xf32>, vector<16x32xf32> -> vector<16x32xf32>
    %59 = arith.addf %38, %58 : vector<16x32xf32>
    %60 = vector.extract_strided_slice %12 {offsets = [0, 0, 16], sizes = [2, 8, 8], strides = [1, 1, 1]} : vector<2x8x96xf32> to vector<2x8x8xf32>
    %61 = vector.extract_strided_slice %12 {offsets = [0, 0, 48], sizes = [2, 8, 8], strides = [1, 1, 1]} : vector<2x8x96xf32> to vector<2x8x8xf32>
    %62 = vector.extract_strided_slice %12 {offsets = [0, 0, 80], sizes = [2, 8, 8], strides = [1, 1, 1]} : vector<2x8x96xf32> to vector<2x8x8xf32>
    "tpu.trace_start"() <{level = 10 : i32, message = "bqd,bkd->bqk"}> : () -> ()
    %cst_25 = arith.constant dense<0.000000e+00> : vector<2x8x8xf32>
    %63 = tpu.matmul %60, %61, %cst_25 {dimension_numbers = #tpu.dot_dimension_numbers<[2], [2], [1], [1], [0, 0, 0, 1, 1, 1], [0], [0]>} : vector<2x8x8xf32>, vector<2x8x8xf32>, vector<2x8x8xf32> -> vector<2x8x8xf32>
    "tpu.trace_stop"() : () -> ()
    %64 = vector.broadcast %6 : vector<2x1x8xf32> to vector<2x8x8xf32>
    %65 = arith.addf %63, %64 : vector<2x8x8xf32>
    %cst_26 = arith.constant dense<0xFF800000> : vector<2x8xf32>
    %66 = vector.multi_reduction <maximumf>, %65, %cst_26 [2] : vector<2x8x8xf32> to vector<2x8xf32>
    %67 = vector.shape_cast %66 : vector<2x8xf32> to vector<2x8x1xf32>
    %68 = vector.broadcast %67 : vector<2x8x1xf32> to vector<2x8x8xf32>
    %69 = arith.subf %65, %68 : vector<2x8x8xf32>
    %70 = math.exp %69 : vector<2x8x8xf32>
    %cst_27 = arith.constant dense<0.000000e+00> : vector<2x8xf32>
    %71 = vector.multi_reduction <add>, %70, %cst_27 [2] : vector<2x8x8xf32> to vector<2x8xf32>
    %72 = vector.shape_cast %71 : vector<2x8xf32> to vector<2x8x1xf32>
    %73 = tpu.reciprocal %72 : vector<2x8x1xf32> -> vector<2x8x1xf32>
    %74 = vector.broadcast %73 : vector<2x8x1xf32> to vector<2x8x8xf32>
    %75 = arith.mulf %70, %74 : vector<2x8x8xf32>
    "tpu.trace_start"() <{level = 10 : i32, message = "bqk,bkd->bqd"}> : () -> ()
    %cst_28 = arith.constant dense<0.000000e+00> : vector<2x8x8xf32>
    %76 = tpu.matmul %75, %62, %cst_28 {dimension_numbers = #tpu.dot_dimension_numbers<[2], [1], [1], [2], [0, 0, 0, 1, 1, 2], [0], [0]>} : vector<2x8x8xf32>, vector<2x8x8xf32>, vector<2x8x8xf32> -> vector<2x8x8xf32>
    "tpu.trace_stop"() : () -> ()
    %77 = vector.shape_cast %76 : vector<2x8x8xf32> to vector<16x8xf32>
    %c16 = arith.constant 16 : index
    %c0_29 = arith.constant 0 : index
    %78 = vector.load %arg4[%c16, %c0_29] : memref<35x32xf32, #tpu.memory_space<vmem>>, vector<8x32xf32>
    %cst_30 = arith.constant dense<0.000000e+00> : vector<16x32xf32>
    %79 = tpu.matmul %77, %78, %cst_30 {dimension_numbers = #tpu.dot_dimension_numbers<[1], [0], [0], [1], [0, 0, 1, 1], [], []>} : vector<16x8xf32>, vector<8x32xf32>, vector<16x32xf32> -> vector<16x32xf32>
    %80 = arith.addf %59, %79 : vector<16x32xf32>
    %81 = vector.extract_strided_slice %12 {offsets = [0, 0, 24], sizes = [2, 8, 8], strides = [1, 1, 1]} : vector<2x8x96xf32> to vector<2x8x8xf32>
    %82 = vector.extract_strided_slice %12 {offsets = [0, 0, 56], sizes = [2, 8, 8], strides = [1, 1, 1]} : vector<2x8x96xf32> to vector<2x8x8xf32>
    %83 = vector.extract_strided_slice %12 {offsets = [0, 0, 88], sizes = [2, 8, 8], strides = [1, 1, 1]} : vector<2x8x96xf32> to vector<2x8x8xf32>
    "tpu.trace_start"() <{level = 10 : i32, message = "bqd,bkd->bqk"}> : () -> ()
    %cst_31 = arith.constant dense<0.000000e+00> : vector<2x8x8xf32>
    %84 = tpu.matmul %81, %82, %cst_31 {dimension_numbers = #tpu.dot_dimension_numbers<[2], [2], [1], [1], [0, 0, 0, 1, 1, 1], [0], [0]>} : vector<2x8x8xf32>, vector<2x8x8xf32>, vector<2x8x8xf32> -> vector<2x8x8xf32>
    "tpu.trace_stop"() : () -> ()
    %85 = vector.broadcast %6 : vector<2x1x8xf32> to vector<2x8x8xf32>
    %86 = arith.addf %84, %85 : vector<2x8x8xf32>
    %cst_32 = arith.constant dense<0xFF800000> : vector<2x8xf32>
    %87 = vector.multi_reduction <maximumf>, %86, %cst_32 [2] : vector<2x8x8xf32> to vector<2x8xf32>
    %88 = vector.shape_cast %87 : vector<2x8xf32> to vector<2x8x1xf32>
    %89 = vector.broadcast %88 : vector<2x8x1xf32> to vector<2x8x8xf32>
    %90 = arith.subf %86, %89 : vector<2x8x8xf32>
    %91 = math.exp %90 : vector<2x8x8xf32>
    %cst_33 = arith.constant dense<0.000000e+00> : vector<2x8xf32>
    %92 = vector.multi_reduction <add>, %91, %cst_33 [2] : vector<2x8x8xf32> to vector<2x8xf32>
    %93 = vector.shape_cast %92 : vector<2x8xf32> to vector<2x8x1xf32>
    %94 = tpu.reciprocal %93 : vector<2x8x1xf32> -> vector<2x8x1xf32>
    %95 = vector.broadcast %94 : vector<2x8x1xf32> to vector<2x8x8xf32>
    %96 = arith.mulf %91, %95 : vector<2x8x8xf32>
    "tpu.trace_start"() <{level = 10 : i32, message = "bqk,bkd->bqd"}> : () -> ()
    %cst_34 = arith.constant dense<0.000000e+00> : vector<2x8x8xf32>
    %97 = tpu.matmul %96, %83, %cst_34 {dimension_numbers = #tpu.dot_dimension_numbers<[2], [1], [1], [2], [0, 0, 0, 1, 1, 2], [0], [0]>} : vector<2x8x8xf32>, vector<2x8x8xf32>, vector<2x8x8xf32> -> vector<2x8x8xf32>
    "tpu.trace_stop"() : () -> ()
    %98 = vector.shape_cast %97 : vector<2x8x8xf32> to vector<16x8xf32>
    %c24 = arith.constant 24 : index
    %c0_35 = arith.constant 0 : index
    %99 = vector.load %arg4[%c24, %c0_35] : memref<35x32xf32, #tpu.memory_space<vmem>>, vector<8x32xf32>
    %cst_36 = arith.constant dense<0.000000e+00> : vector<16x32xf32>
    %100 = tpu.matmul %98, %99, %cst_36 {dimension_numbers = #tpu.dot_dimension_numbers<[1], [0], [0], [1], [0, 0, 1, 1], [], []>} : vector<16x8xf32>, vector<8x32xf32>, vector<16x32xf32> -> vector<16x32xf32>
    %101 = arith.addf %80, %100 : vector<16x32xf32>
    %102 = tpu.concatenate %33, %54, %75, %96 in 1 : vector<2x8x8xf32>, vector<2x8x8xf32>, vector<2x8x8xf32>, vector<2x8x8xf32> -> vector<2x32x8xf32>
    %c0_37 = arith.constant 0 : index
    %c0_38 = arith.constant 0 : index
    %c0_39 = arith.constant 0 : index
    %103 = vector.load %arg6[%c0_37, %c0_38, %c0_39] : memref<2x32x8xf32, #tpu.memory_space<vmem>>, vector<2x32x8xf32>
    tpu.vector_store %arg6[%c0_37, %c0_38, %c0_39], %102 {strides = array<i32>} : memref<2x32x8xf32, #tpu.memory_space<vmem>>, vector<2x32x8xf32>,
    %cst_40 = arith.constant dense<0.000000e+00> : vector<16xf32>
    %104 = vector.multi_reduction <add>, %101, %cst_40 [1] : vector<16x32xf32> to vector<16xf32>
    %105 = vector.shape_cast %104 : vector<16xf32> to vector<16x1xf32>
    %cst_41 = arith.constant 3.200000e+01 : f32
    %106 = vector.broadcast %cst_41 : f32 to vector<16x1xf32>
    %107 = arith.divf %105, %106 : vector<16x1xf32>
    %108 = vector.broadcast %107 : vector<16x1xf32> to vector<16x32xf32>
    %109 = arith.subf %101, %108 : vector<16x32xf32>
    %110 = arith.mulf %109, %109 : vector<16x32xf32>
    %cst_42 = arith.constant dense<0.000000e+00> : vector<16xf32>
    %111 = vector.multi_reduction <add>, %110, %cst_42 [1] : vector<16x32xf32> to vector<16xf32>
    %112 = vector.shape_cast %111 : vector<16xf32> to vector<16x1xf32>
    %cst_43 = arith.constant 3.200000e+01 : f32
    %113 = vector.broadcast %cst_43 : f32 to vector<16x1xf32>
    %114 = arith.divf %112, %113 : vector<16x1xf32>
    %115 = vector.broadcast %107 : vector<16x1xf32> to vector<16x32xf32>
    %116 = arith.subf %101, %115 : vector<16x32xf32>
    %cst_44 = arith.constant 9.99999996E-13 : f32
    %117 = vector.broadcast %cst_44 : f32 to vector<16x1xf32>
    %118 = arith.addf %114, %117 : vector<16x1xf32>
    %119 = math.rsqrt %118 : vector<16x1xf32>
    %120 = vector.broadcast %119 : vector<16x1xf32> to vector<16x32xf32>
    %121 = arith.mulf %116, %120 : vector<16x32xf32>
    %122 = vector.broadcast %14 : vector<1x32xf32> to vector<16x32xf32>
    %123 = arith.mulf %121, %122 : vector<16x32xf32>
    %124 = vector.broadcast %15 : vector<1x32xf32> to vector<16x32xf32>
    %125 = arith.addf %123, %124 : vector<16x32xf32>
    %c0_45 = arith.constant 0 : index
    %c0_46 = arith.constant 0 : index
    %126 = vector.load %arg5[%c0_45, %c0_46] : memref<16x32xf32, #tpu.memory_space<vmem>>, vector<16x32xf32>
    tpu.vector_store %arg5[%c0_45, %c0_46], %125 {strides = array<i32>} : memref<16x32xf32, #tpu.memory_space<vmem>>, vector<16x32xf32>,
    return
  }
  func.func @transform_0(%arg0: i32) -> (i32, i32) {
    %c0_i32 = arith.constant 0 : i32
    %c0_i32_0 = arith.constant 0 : i32
    %c0_i32_1 = arith.constant 0 : i32
    return %c0_i32, %c0_i32_0 : i32, i32
  }
  func.func @transform_1(%arg0: i32) -> (i32, i32) {
    %c0_i32 = arith.constant 0 : i32
    %c0_i32_0 = arith.constant 0 : i32
    %c0_i32_1 = arith.constant 0 : i32
    return %c0_i32, %c0_i32_0 : i32, i32
  }
  func.func @transform_2(%arg0: i32) -> (i32, i32) {
    %c0_i32 = arith.constant 0 : i32
    %c0_i32_0 = arith.constant 0 : i32
    %c0_i32_1 = arith.constant 0 : i32
    return %c0_i32, %c0_i32_0 : i32, i32
  }
  func.func @transform_3(%arg0: i32) -> (i32, i32) {
    %c0_i32 = arith.constant 0 : i32
    %c0_i32_0 = arith.constant 0 : i32
    %c0_i32_1 = arith.constant 0 : i32
    return %c0_i32, %c0_i32_0 : i32, i32
  }
  func.func @transform_4(%arg0: i32) -> (i32, i32) {
    %c0_i32 = arith.constant 0 : i32
    %c0_i32_0 = arith.constant 0 : i32
    %c0_i32_1 = arith.constant 0 : i32
    return %c0_i32, %c0_i32_0 : i32, i32
  }
  func.func @transform_5(%arg0: i32) -> (i32, i32, i32) {
    %c0_i32 = arith.constant 0 : i32
    %c0_i32_0 = arith.constant 0 : i32
    %c0_i32_1 = arith.constant 0 : i32
    %c0_i32_2 = arith.constant 0 : i32
    return %c0_i32, %c0_i32_0, %c0_i32_1 : i32, i32, i32
  }
}

</mosaic_0001>

<llo_original>
// kernel: custom_bert_attention.1
$region0: #{custom_bert_attention.1}
  #allocation0 [shape = 'u32[]', space=smem, size = 0x4, offset = 0x4, fixed_abs, tag = 'smem constant byte address 0x4 - core index']
  #allocation1 [shape = 'u32[144,128]{1,0:T(1,128)}', space=vmem, size = 0x12000, scoped, tag = 'internal scratch']
  %s0 = inlined_call_operand.vmem [shape: f32[2,8], index: 0, kind: input, shape index: {}]
  %s1 = inlined_call_operand.vmem [shape: f32[16,32], index: 1, kind: input, shape index: {}]
  %s2 = inlined_call_operand.vmem [shape: f32[33,96], index: 2, kind: input, shape index: {}]
  %s3 = inlined_call_operand.vmem [shape: f32[35,32], index: 3, kind: input, shape index: {}]
  %s4 = inlined_call_operand.hbm [shape: f32[16,32], index: 4, kind: output, shape index: {0}]
  %s5 = inlined_call_operand.hbm [shape: f32[2,32,8], index: 5, kind: output, shape index: {1}]
  %6 = xla_tuple %s4, %s5
  %s7 = sld [smem:[#allocation0]]
  $region34: #{custom_bert_attention.1} parent=0
    _
  %s9 = ssub.s32 1, %s7
  %s10 = scalar_select 0, %s9, %s7
  $region1: #{custom_bert_attention.1} parent=0
    #allocation2 [shape = 'u8[8192]{0}', space=vmem, size = 0x2000, scoped, tag = 'output window, operand 0, single buffered']
    #allocation3 [shape = 's32[1]{0}', space=sflag, size = 0x4, scoped, tag = 'scoped memory for custom_bert_attention.1']
    #allocation4 [shape = 'u8[32768]{0}', space=vmem, size = 0x8000, scoped, tag = 'output window, operand 1, single buffered']
    #allocation5 [shape = 's32[1]{0}', space=sflag, size = 0x4, scoped, tag = 'scoped memory for custom_bert_attention.1']
    %11 = vsyncpa [#allocation3], 0
    %12 = vsyncpa [#allocation5], 0
    // Predicated region
    $region2: #{custom_bert_attention.1} parent=1 // pred_check
      _
    $region3: #{custom_bert_attention.1} parent=1 // pred_check_branch
      %14 = sbr.rel (0) target = $region5
    $region4: #{custom_bert_attention.1} parent=1 // pred_region
      _
    $region5: #{custom_bert_attention.1} parent=1 // pred_fallthru
      _
    // Predicated region
    $region6: #{custom_bert_attention.1} parent=1 // pred_check
      _
    $region7: #{custom_bert_attention.1} parent=1 // pred_check_branch
      %16 = sbr.rel (0) target = $region9
    $region8: #{custom_bert_attention.1} parent=1 // pred_region
      _
    $region9: #{custom_bert_attention.1} parent=1 // pred_fallthru
      _
    // Predicated region
    $region10: #{custom_bert_attention.1} parent=1 // pred_check
      _
    $region11: #{custom_bert_attention.1} parent=1 // pred_check_branch
      %18 = sbr.rel (0) target = $region13
    $region12: #{custom_bert_attention.1} parent=1 // pred_region
      _
    $region13: #{custom_bert_attention.1} parent=1 // pred_fallthru
      _
    // Predicated region
    $region14: #{custom_bert_attention.1} parent=1 // pred_check
      _
    $region15: #{custom_bert_attention.1} parent=1 // pred_check_branch
      %20 = sbr.rel (0) target = $region17
    $region16: #{custom_bert_attention.1} parent=1 // pred_region
      _
    $region17: #{custom_bert_attention.1} parent=1 // pred_fallthru
      _
    %v21 = vld [vmem:[%s1] sm:$0xff]
    %v22 = vld [vmem:[%s1 + $0x8] sm:$0xff]
    %v23 = vld [vmem:[%s0] sm:$0x3]
    %v24 = vsub.f32 1.0, %v23
    %v25 = vmul.f32 %v24, -10000.0
    %v28 = vunpack.c.l.s4 1966171168
    %v29 = vunpack.c.0.s8 %v28
    %v30 = vlaneseq
    %v31 = vshrl.u32 %v30, 7
    %v32 = vsub.s32 %v29, %v31
    %v33 = vrot.slane %v25, %v32
    %v34 = vcombine.high %v33, %v33
    %v36 = vunpack.c.l.s4 1966171168
    %v37 = vunpack.c.0.s8 %v36
    %v38 = vlaneseq
    %v39 = vshrl.u32 %v38, 7
    %v40 = vsub.s32 %v37, %v39
    %v41 = vrot.slane %v33, %v40
    %v43 = vunpack.c.l.s4 1966171168
    %v44 = vunpack.c.0.s8 %v43
    %v45 = vlaneseq
    %v46 = vshrl.u32 %v45, 7
    %v47 = vsub.s32 %v44, %v46
    %v48 = vrot.slane %v34, %v47
    %v49 = vld [vmem:[%s2] sm:$0xff]
    %v50 = vld [vmem:[%s2 + $0x8] sm:$0xff]
    %v51 = vld [vmem:[%s2 + $0x10] sm:$0xff]
    %v52 = vld [vmem:[%s2 + $0x18] sm:$0xff]
    %v53 = vld [vmem:[%s2 + $0x20] sm:$0x1]
    %v54 = vlaneseq
    %v55 = vshrl.u32 %v54, 7
    %v56 = vsub.s32 0, %v55
    %v57 = vrot.slane %v53, %v56
    %vm58 = vcmask 261120
    %v60 = vsel %vm58, %v21, 0
    %v63 = vsel %vm58, %v22, 0
    %65 = vmatprep.subr.mxu0 0.0
    %66 = vmatpush1.msra.mxu0 %v49
    %67 = vmatprep.subr.mxu0 0.0
    %68 = vmatpush1.msra.mxu0 %v50
    %69 = vmatprep.subr.mxu0 0.0
    %70 = vmatpush1.msra.mxu0 %v51
    %71 = vmatprep.subr.mxu0 0.0
    %72 = vmatpush1.msra.mxu0 %v52
    %73 = vmatprep.subr.mxu0 0.0
    %74 = vmatpush1.msra.mxu0 0.0
    %75 = vmatprep.subr.mxu0 0.0
    %76 = vmatpush1.msra.mxu0 0.0
    %77 = vmatprep.subr.mxu0 0.0
    %78 = vmatpush1.msra.mxu0 0.0
    %79 = vmatprep.subr.mxu0 0.0
    %80 = vmatpush1.msra.mxu0 0.0
    %81 = vmatprep.subr.mxu0 0.0
    %82 = vmatpush1.msra.mxu0 0.0
    %83 = vmatprep.subr.mxu0 0.0
    %84 = vmatpush1.msra.mxu0 0.0
    %85 = vmatprep.subr.mxu0 0.0
    %86 = vmatpush1.msra.mxu0 0.0
    %87 = vmatprep.subr.mxu0 0.0
    %88 = vmatpush1.msra.mxu0 0.0
    %89 = vmatprep.subr.mxu0 0.0
    %90 = vmatpush1.msra.mxu0 0.0
    %91 = vmatprep.subr.mxu0 0.0
    %92 = vmatpush1.msra.mxu0 0.0
    %93 = vmatprep.subr.mxu0 0.0
    %94 = vmatpush1.msra.mxu0 0.0
    %95 = vmatprep.subr.mxu0 0.0
    %96 = vmatpush1.msra.mxu0 0.0
    %97 = vmatprep.subr.mxu0 0.0
    %98 = vmatpush1.msra.mxu0 0.0
    %99 = vmatprep.subr.mxu0 0.0
    %100 = vmatpush1.msra.mxu0 0.0
    %101 = vmatprep.subr.mxu0 0.0
    %102 = vmatpush1.msra.mxu0 0.0
    %103 = vmatprep.subr.mxu0 0.0
    %104 = vmatpush1.msra.mxu0 0.0
    %105 = vmatprep.subr.mxu0 0.0
    %106 = vmatpush1.msra.mxu0 0.0
    %107 = vmatprep.subr.mxu0 0.0
    %108 = vmatpush1.msra.mxu0 0.0
    %109 = vmatprep.subr.mxu0 0.0
    %110 = vmatpush1.msra.mxu0 0.0
    %111 = vmatprep.subr.mxu0 0.0
    %112 = vmatpush1.msra.mxu0 0.0
    %113 = vmatprep.subr.mxu0 0.0
    %114 = vmatpush1.msra.mxu0 0.0
    %115 = vmatprep.subr.mxu0 0.0
    %116 = vmatpush1.msra.mxu0 0.0
    %117 = vmatprep.subr.mxu0 0.0
    %118 = vmatpush1.msra.mxu0 0.0
    %119 = vmatprep.subr.mxu0 0.0
    %120 = vmatpush1.msra.mxu0 0.0
    %121 = vmatprep.subr.mxu0 0.0
    %122 = vmatpush1.msra.mxu0 0.0
    %123 = vmatprep.subr.mxu0 0.0
    %124 = vmatpush1.msra.mxu0 0.0
    %125 = vmatprep.subr.mxu0 0.0
    %126 = vmatpush1.msra.mxu0 0.0
    %127 = vmatprep.subr.mxu0 0.0
    %128 = vmatpush1.msra.mxu0 0.0
    %129 = vmatprep.mubr.f32.mxu0 0.0
    %130 = vmatmul.mubr.f32.gmra.mrb[0].mxu0 %v60
    %v131 = vpop.f32.mrb[0].mxu0
    %v132 = vadd.f32 %v57, %v131
    %v133 = vpop.f32.mrb[0].mxu0
    %134 = vmatprep.mubr.f32.mxu0 0.0
    %135 = vmatmul.mubr.f32.gmra.mrb[0].mxu0 %v63
    %v136 = vpop.f32.mrb[0].mxu0
    %v137 = vadd.f32 %v57, %v136
    %v138 = vpop.f32.mrb[0].mxu0
    %139 = vdwg.mxu0
    %v140 = vld [vmem:[%s3 + $0x20] sm:$0x1]
    %v141 = vld [vmem:[%s3 + $0x21] sm:$0x1]
    %v142 = vld [vmem:[%s3 + $0x22] sm:$0x1]
    %v143 = vlaneseq
    %v144 = vshrl.u32 %v143, 7
    %v145 = vsub.s32 0, %v144
    %v146 = vrot.slane %v140, %v145
    %v147 = vadd.f32 %v21, %v146
    %v148 = vadd.f32 %v22, %v146
    %v149 = vlaneseq
    %v150 = vshrl.u32 %v149, 7
    %v151 = vsub.s32 0, %v150
    %v152 = vrot.slane %v41, %v151
    %v153 = vlaneseq
    %v154 = vshrl.u32 %v153, 7
    %v155 = vsub.s32 0, %v154
    %v156 = vrot.slane %v48, %v155
    %160 = vrot.lane.b32.xlu0 %v132, 96
    %v161 = vpop.permute.xlu0 %160
    %vm162 = vcmask 64512
    %v163 = vsel %vm162, %v132, 0
    %v165 = vsel %vm162, %v161, 0
    %167 = vmatprep.subr.mxu0 0.0
    %168 = vmatpush1.xpose.msra.mxu0 %v165
    %169 = vmatprep.subr.mxu0 0.0
    %170 = vmatpush1.xpose.msra.mxu0 0.0
    %171 = vmatprep.subr.mxu0 0.0
    %172 = vmatpush1.xpose.msra.mxu0 0.0
    %173 = vmatprep.subr.mxu0 0.0
    %174 = vmatpush1.xpose.msra.mxu0 0.0
    %175 = vmatprep.subr.mxu0 0.0
    %176 = vmatpush1.xpose.msra.mxu0 0.0
    %177 = vmatprep.subr.mxu0 0.0
    %178 = vmatpush1.xpose.msra.mxu0 0.0
    %179 = vmatprep.subr.mxu0 0.0
    %180 = vmatpush1.xpose.msra.mxu0 0.0
    %181 = vmatprep.subr.mxu0 0.0
    %182 = vmatpush1.xpose.msra.mxu0 0.0
    %183 = vmatprep.subr.mxu0 0.0
    %184 = vmatpush1.xpose.msra.mxu0 0.0
    %185 = vmatprep.subr.mxu0 0.0
    %186 = vmatpush1.xpose.msra.mxu0 0.0
    %187 = vmatprep.subr.mxu0 0.0
    %188 = vmatpush1.xpose.msra.mxu0 0.0
    %189 = vmatprep.subr.mxu0 0.0
    %190 = vmatpush1.xpose.msra.mxu0 0.0
    %191 = vmatprep.subr.mxu0 0.0
    %192 = vmatpush1.xpose.msra.mxu0 0.0
    %193 = vmatprep.subr.mxu0 0.0
    %194 = vmatpush1.xpose.msra.mxu0 0.0
    %195 = vmatprep.subr.mxu0 0.0
    %196 = vmatpush1.xpose.msra.mxu0 0.0
    %197 = vmatprep.subr.mxu0 0.0
    %198 = vmatpush1.xpose.msra.mxu0 0.0
    %199 = vmatprep.subr.mxu0 0.0
    %200 = vmatpush1.xpose.msra.mxu0 0.0
    %201 = vmatprep.subr.mxu0 0.0
    %202 = vmatpush1.xpose.msra.mxu0 0.0
    %203 = vmatprep.subr.mxu0 0.0
    %204 = vmatpush1.xpose.msra.mxu0 0.0
    %205 = vmatprep.subr.mxu0 0.0
    %206 = vmatpush1.xpose.msra.mxu0 0.0
    %207 = vmatprep.subr.mxu0 0.0
    %208 = vmatpush1.xpose.msra.mxu0 0.0
    %209 = vmatprep.subr.mxu0 0.0
    %210 = vmatpush1.xpose.msra.mxu0 0.0
    %211 = vmatprep.subr.mxu0 0.0
    %212 = vmatpush1.xpose.msra.mxu0 0.0
    %213 = vmatprep.subr.mxu0 0.0
    %214 = vmatpush1.xpose.msra.mxu0 0.0
    %215 = vmatprep.subr.mxu0 0.0
    %216 = vmatpush1.xpose.msra.mxu0 0.0
    %217 = vmatprep.subr.mxu0 0.0
    %218 = vmatpush1.xpose.msra.mxu0 0.0
    %219 = vmatprep.subr.mxu0 0.0
    %220 = vmatpush1.xpose.msra.mxu0 0.0
    %221 = vmatprep.subr.mxu0 0.0
    %222 = vmatpush1.xpose.msra.mxu0 0.0
    %223 = vmatprep.subr.mxu0 0.0
    %224 = vmatpush1.xpose.msra.mxu0 0.0
    %225 = vmatprep.subr.mxu0 0.0
    %226 = vmatpush1.xpose.msra.mxu0 0.0
    %227 = vmatprep.subr.mxu0 0.0
    %228 = vmatpush1.xpose.msra.mxu0 0.0
    %229 = vmatprep.subr.mxu0 0.0
    %230 = vmatpush1.xpose.msra.mxu0 0.0
    %231 = vmatprep.mubr.f32.mxu0 0.0
    %232 = vmatmul.mubr.f32.gmra.mrb[0].mxu0 %v163
    %v233 = vpop.f32.mrb[0].mxu0
    %v234 = vadd.f32 %v152, %v233
    %v235 = vpop.f32.mrb[0].mxu0
    %236 = vdwg.mxu0
    %238 = vrot.lane.b32.xlu0 %v137, 96
    %v239 = vpop.permute.xlu0 %238
    %v240 = vsel %vm162, %v137, 0
    %v242 = vsel %vm162, %v239, 0
    %244 = vmatprep.subr.mxu0 0.0
    %245 = vmatpush1.xpose.msra.mxu0 %v242
    %246 = vmatprep.subr.mxu0 0.0
    %247 = vmatpush1.xpose.msra.mxu0 0.0
    %248 = vmatprep.subr.mxu0 0.0
    %249 = vmatpush1.xpose.msra.mxu0 0.0
    %250 = vmatprep.subr.mxu0 0.0
    %251 = vmatpush1.xpose.msra.mxu0 0.0
    %252 = vmatprep.subr.mxu0 0.0
    %253 = vmatpush1.xpose.msra.mxu0 0.0
    %254 = vmatprep.subr.mxu0 0.0
    %255 = vmatpush1.xpose.msra.mxu0 0.0
    %256 = vmatprep.subr.mxu0 0.0
    %257 = vmatpush1.xpose.msra.mxu0 0.0
    %258 = vmatprep.subr.mxu0 0.0
    %259 = vmatpush1.xpose.msra.mxu0 0.0
    %260 = vmatprep.subr.mxu0 0.0
    %261 = vmatpush1.xpose.msra.mxu0 0.0
    %262 = vmatprep.subr.mxu0 0.0
    %263 = vmatpush1.xpose.msra.mxu0 0.0
    %264 = vmatprep.subr.mxu0 0.0
    %265 = vmatpush1.xpose.msra.mxu0 0.0
    %266 = vmatprep.subr.mxu0 0.0
    %267 = vmatpush1.xpose.msra.mxu0 0.0
    %268 = vmatprep.subr.mxu0 0.0
    %269 = vmatpush1.xpose.msra.mxu0 0.0
    %270 = vmatprep.subr.mxu0 0.0
    %271 = vmatpush1.xpose.msra.mxu0 0.0
    %272 = vmatprep.subr.mxu0 0.0
    %273 = vmatpush1.xpose.msra.mxu0 0.0
    %274 = vmatprep.subr.mxu0 0.0
    %275 = vmatpush1.xpose.msra.mxu0 0.0
    %276 = vmatprep.subr.mxu0 0.0
    %277 = vmatpush1.xpose.msra.mxu0 0.0
    %278 = vmatprep.subr.mxu0 0.0
    %279 = vmatpush1.xpose.msra.mxu0 0.0
    %280 = vmatprep.subr.mxu0 0.0
    %281 = vmatpush1.xpose.msra.mxu0 0.0
    %282 = vmatprep.subr.mxu0 0.0
    %283 = vmatpush1.xpose.msra.mxu0 0.0
    %284 = vmatprep.subr.mxu0 0.0
    %285 = vmatpush1.xpose.msra.mxu0 0.0
    %286 = vmatprep.subr.mxu0 0.0
    %287 = vmatpush1.xpose.msra.mxu0 0.0
    %288 = vmatprep.subr.mxu0 0.0
    %289 = vmatpush1.xpose.msra.mxu0 0.0
    %290 = vmatprep.subr.mxu0 0.0
    %291 = vmatpush1.xpose.msra.mxu0 0.0
    %292 = vmatprep.subr.mxu0 0.0
    %293 = vmatpush1.xpose.msra.mxu0 0.0
    %294 = vmatprep.subr.mxu0 0.0
    %295 = vmatpush1.xpose.msra.mxu0 0.0
    %296 = vmatprep.subr.mxu0 0.0
    %297 = vmatpush1.xpose.msra.mxu0 0.0
    %298 = vmatprep.subr.mxu0 0.0
    %299 = vmatpush1.xpose.msra.mxu0 0.0
    %300 = vmatprep.subr.mxu0 0.0
    %301 = vmatpush1.xpose.msra.mxu0 0.0
    %302 = vmatprep.subr.mxu0 0.0
    %303 = vmatpush1.xpose.msra.mxu0 0.0
    %304 = vmatprep.subr.mxu0 0.0
    %305 = vmatpush1.xpose.msra.mxu0 0.0
    %306 = vmatprep.subr.mxu0 0.0
    %307 = vmatpush1.xpose.msra.mxu0 0.0
    %308 = vmatprep.mubr.f32.mxu0 0.0
    %309 = vmatmul.mubr.f32.gmra.mrb[0].mxu0 %v240
    %v310 = vpop.f32.mrb[0].mxu0
    %v311 = vadd.f32 %v156, %v310
    %v312 = vpop.f32.mrb[0].mxu0
    %313 = vdwg.mxu0
    %v314 = vsel %vm162, %v234, -inf
    %315 = vmax.xlane.f32.xlu0 %v314
    %v316 = vpop.xlane.xlu0 %315
    %v317 = vsel %vm162, %v311, -inf
    %318 = vmax.xlane.f32.xlu0 %v317
    %v319 = vpop.xlane.xlu0 %318
    %v320 = vsub.f32 %v234, %v316
    %v321 = vsub.f32 %v311, %v319
    %v322 = vmul.f32 %v320, 1.442695
    %v323 = vpow.pop %v322
    %v324 = vmul.f32 %v321, 1.442695
    %v325 = vpow.pop %v324
    %v326 = vsel %vm162, %v323, 0.0
    %327 = vadd.xlane.f32.xlu0 %v326
    %v328 = vpop.xlane.xlu0 %327
    %v329 = vsel %vm162, %v325, 0.0
    %330 = vadd.xlane.f32.xlu0 %v329
    %v331 = vpop.xlane.xlu0 %330
    %v332 = vrcp.pop %v328
    %v333 = vrcp.pop %v331
    %v334 = vmul.f32 %v323, %v332
    %v335 = vmul.f32 %v325, %v333
    %336 = vrot.lane.b32.xlu0 %v132, 64
    %v337 = vpop.permute.xlu0 %336
    %v340 = vsel %vm162, %v334, 0
    %342 = vmatprep.subr.mxu0 0.0
    %343 = vmatpush1.msra.mxu0 %v337
    %344 = vmatprep.subr.mxu0 0.0
    %345 = vmatpush1.msra.mxu0 0.0
    %346 = vmatprep.subr.mxu0 0.0
    %347 = vmatpush1.msra.mxu0 0.0
    %348 = vmatprep.subr.mxu0 0.0
    %349 = vmatpush1.msra.mxu0 0.0
    %350 = vmatprep.subr.mxu0 0.0
    %351 = vmatpush1.msra.mxu0 0.0
    %352 = vmatprep.subr.mxu0 0.0
    %353 = vmatpush1.msra.mxu0 0.0
    %354 = vmatprep.subr.mxu0 0.0
    %355 = vmatpush1.msra.mxu0 0.0
    %356 = vmatprep.subr.mxu0 0.0
    %357 = vmatpush1.msra.mxu0 0.0
    %358 = vmatprep.subr.mxu0 0.0
    %359 = vmatpush1.msra.mxu0 0.0
    %360 = vmatprep.subr.mxu0 0.0
    %361 = vmatpush1.msra.mxu0 0.0
    %362 = vmatprep.subr.mxu0 0.0
    %363 = vmatpush1.msra.mxu0 0.0
    %364 = vmatprep.subr.mxu0 0.0
    %365 = vmatpush1.msra.mxu0 0.0
    %366 = vmatprep.subr.mxu0 0.0
    %367 = vmatpush1.msra.mxu0 0.0
    %368 = vmatprep.subr.mxu0 0.0
    %369 = vmatpush1.msra.mxu0 0.0
    %370 = vmatprep.subr.mxu0 0.0
    %371 = vmatpush1.msra.mxu0 0.0
    %372 = vmatprep.subr.mxu0 0.0
    %373 = vmatpush1.msra.mxu0 0.0
    %374 = vmatprep.subr.mxu0 0.0
    %375 = vmatpush1.msra.mxu0 0.0
    %376 = vmatprep.subr.mxu0 0.0
    %377 = vmatpush1.msra.mxu0 0.0
    %378 = vmatprep.subr.mxu0 0.0
    %379 = vmatpush1.msra.mxu0 0.0
    %380 = vmatprep.subr.mxu0 0.0
    %381 = vmatpush1.msra.mxu0 0.0
    %382 = vmatprep.subr.mxu0 0.0
    %383 = vmatpush1.msra.mxu0 0.0
    %384 = vmatprep.subr.mxu0 0.0
    %385 = vmatpush1.msra.mxu0 0.0
    %386 = vmatprep.subr.mxu0 0.0
    %387 = vmatpush1.msra.mxu0 0.0
    %388 = vmatprep.subr.mxu0 0.0
    %389 = vmatpush1.msra.mxu0 0.0
    %390 = vmatprep.subr.mxu0 0.0
    %391 = vmatpush1.msra.mxu0 0.0
    %392 = vmatprep.subr.mxu0 0.0
    %393 = vmatpush1.msra.mxu0 0.0
    %394 = vmatprep.subr.mxu0 0.0
    %395 = vmatpush1.msra.mxu0 0.0
    %396 = vmatprep.subr.mxu0 0.0
    %397 = vmatpush1.msra.mxu0 0.0
    %398 = vmatprep.subr.mxu0 0.0
    %399 = vmatpush1.msra.mxu0 0.0
    %400 = vmatprep.subr.mxu0 0.0
    %401 = vmatpush1.msra.mxu0 0.0
    %402 = vmatprep.subr.mxu0 0.0
    %403 = vmatpush1.msra.mxu0 0.0
    %404 = vmatprep.subr.mxu0 0.0
    %405 = vmatpush1.msra.mxu0 0.0
    %406 = vmatprep.mubr.f32.mxu0 0.0
    %407 = vmatmul.mubr.f32.gmra.mrb[0].mxu0 %v340
    %v408 = vpop.f32.mrb[0].mxu0
    %v409 = vadd.f32 0.0, %v408
    %v410 = vpop.f32.mrb[0].mxu0
    %411 = vdwg.mxu0
    %412 = vrot.lane.b32.xlu0 %v137, 64
    %v413 = vpop.permute.xlu0 %412
    %v416 = vsel %vm162, %v335, 0
    %418 = vmatprep.subr.mxu0 0.0
    %419 = vmatpush1.msra.mxu0 %v413
    %420 = vmatprep.subr.mxu0 0.0
    %421 = vmatpush1.msra.mxu0 0.0
    %422 = vmatprep.subr.mxu0 0.0
    %423 = vmatpush1.msra.mxu0 0.0
    %424 = vmatprep.subr.mxu0 0.0
    %425 = vmatpush1.msra.mxu0 0.0
    %426 = vmatprep.subr.mxu0 0.0
    %427 = vmatpush1.msra.mxu0 0.0
    %428 = vmatprep.subr.mxu0 0.0
    %429 = vmatpush1.msra.mxu0 0.0
    %430 = vmatprep.subr.mxu0 0.0
    %431 = vmatpush1.msra.mxu0 0.0
    %432 = vmatprep.subr.mxu0 0.0
    %433 = vmatpush1.msra.mxu0 0.0
    %434 = vmatprep.subr.mxu0 0.0
    %435 = vmatpush1.msra.mxu0 0.0
    %436 = vmatprep.subr.mxu0 0.0
    %437 = vmatpush1.msra.mxu0 0.0
    %438 = vmatprep.subr.mxu0 0.0
    %439 = vmatpush1.msra.mxu0 0.0
    %440 = vmatprep.subr.mxu0 0.0
    %441 = vmatpush1.msra.mxu0 0.0
    %442 = vmatprep.subr.mxu0 0.0
    %443 = vmatpush1.msra.mxu0 0.0
    %444 = vmatprep.subr.mxu0 0.0
    %445 = vmatpush1.msra.mxu0 0.0
    %446 = vmatprep.subr.mxu0 0.0
    %447 = vmatpush1.msra.mxu0 0.0
    %448 = vmatprep.subr.mxu0 0.0
    %449 = vmatpush1.msra.mxu0 0.0
    %450 = vmatprep.subr.mxu0 0.0
    %451 = vmatpush1.msra.mxu0 0.0
    %452 = vmatprep.subr.mxu0 0.0
    %453 = vmatpush1.msra.mxu0 0.0
    %454 = vmatprep.subr.mxu0 0.0
    %455 = vmatpush1.msra.mxu0 0.0
    %456 = vmatprep.subr.mxu0 0.0
    %457 = vmatpush1.msra.mxu0 0.0
    %458 = vmatprep.subr.mxu0 0.0
    %459 = vmatpush1.msra.mxu0 0.0
    %460 = vmatprep.subr.mxu0 0.0
    %461 = vmatpush1.msra.mxu0 0.0
    %462 = vmatprep.subr.mxu0 0.0
    %463 = vmatpush1.msra.mxu0 0.0
    %464 = vmatprep.subr.mxu0 0.0
    %465 = vmatpush1.msra.mxu0 0.0
    %466 = vmatprep.subr.mxu0 0.0
    %467 = vmatpush1.msra.mxu0 0.0
    %468 = vmatprep.subr.mxu0 0.0
    %469 = vmatpush1.msra.mxu0 0.0
    %470 = vmatprep.subr.mxu0 0.0
    %471 = vmatpush1.msra.mxu0 0.0
    %472 = vmatprep.subr.mxu0 0.0
    %473 = vmatpush1.msra.mxu0 0.0
    %474 = vmatprep.subr.mxu0 0.0
    %475 = vmatpush1.msra.mxu0 0.0
    %476 = vmatprep.subr.mxu0 0.0
    %477 = vmatpush1.msra.mxu0 0.0
    %478 = vmatprep.subr.mxu0 0.0
    %479 = vmatpush1.msra.mxu0 0.0
    %480 = vmatprep.subr.mxu0 0.0
    %481 = vmatpush1.msra.mxu0 0.0
    %482 = vmatprep.mubr.f32.mxu0 0.0
    %483 = vmatmul.mubr.f32.gmra.mrb[0].mxu0 %v416
    %v484 = vpop.f32.mrb[0].mxu0
    %v485 = vadd.f32 0.0, %v484
    %v486 = vpop.f32.mrb[0].mxu0
    %487 = vdwg.mxu0
    %v488 = vld [vmem:[%s3] sm:$0xff]
    %v490 = vsel %vm162, %v409, 0
    %v493 = vsel %vm162, %v485, 0
    %495 = vmatprep.subr.mxu0 0.0
    %496 = vmatpush1.msra.mxu0 %v488
    %497 = vmatprep.subr.mxu0 0.0
    %498 = vmatpush1.msra.mxu0 0.0
    %499 = vmatprep.subr.mxu0 0.0
    %500 = vmatpush1.msra.mxu0 0.0
    %501 = vmatprep.subr.mxu0 0.0
    %502 = vmatpush1.msra.mxu0 0.0
    %503 = vmatprep.subr.mxu0 0.0
    %504 = vmatpush1.msra.mxu0 0.0
    %505 = vmatprep.subr.mxu0 0.0
    %506 = vmatpush1.msra.mxu0 0.0
    %507 = vmatprep.subr.mxu0 0.0
    %508 = vmatpush1.msra.mxu0 0.0
    %509 = vmatprep.subr.mxu0 0.0
    %510 = vmatpush1.msra.mxu0 0.0
    %511 = vmatprep.subr.mxu0 0.0
    %512 = vmatpush1.msra.mxu0 0.0
    %513 = vmatprep.subr.mxu0 0.0
    %514 = vmatpush1.msra.mxu0 0.0
    %515 = vmatprep.subr.mxu0 0.0
    %516 = vmatpush1.msra.mxu0 0.0
    %517 = vmatprep.subr.mxu0 0.0
    %518 = vmatpush1.msra.mxu0 0.0
    %519 = vmatprep.subr.mxu0 0.0
    %520 = vmatpush1.msra.mxu0 0.0
    %521 = vmatprep.subr.mxu0 0.0
    %522 = vmatpush1.msra.mxu0 0.0
    %523 = vmatprep.subr.mxu0 0.0
    %524 = vmatpush1.msra.mxu0 0.0
    %525 = vmatprep.subr.mxu0 0.0
    %526 = vmatpush1.msra.mxu0 0.0
    %527 = vmatprep.subr.mxu0 0.0
    %528 = vmatpush1.msra.mxu0 0.0
    %529 = vmatprep.subr.mxu0 0.0
    %530 = vmatpush1.msra.mxu0 0.0
    %531 = vmatprep.subr.mxu0 0.0
    %532 = vmatpush1.msra.mxu0 0.0
    %533 = vmatprep.subr.mxu0 0.0
    %534 = vmatpush1.msra.mxu0 0.0
    %535 = vmatprep.subr.mxu0 0.0
    %536 = vmatpush1.msra.mxu0 0.0
    %537 = vmatprep.subr.mxu0 0.0
    %538 = vmatpush1.msra.mxu0 0.0
    %539 = vmatprep.subr.mxu0 0.0
    %540 = vmatpush1.msra.mxu0 0.0
    %541 = vmatprep.subr.mxu0 0.0
    %542 = vmatpush1.msra.mxu0 0.0
    %543 = vmatprep.subr.mxu0 0.0
    %544 = vmatpush1.msra.mxu0 0.0
    %545 = vmatprep.subr.mxu0 0.0
    %546 = vmatpush1.msra.mxu0 0.0
    %547 = vmatprep.subr.mxu0 0.0
    %548 = vmatpush1.msra.mxu0 0.0
    %549 = vmatprep.subr.mxu0 0.0
    %550 = vmatpush1.msra.mxu0 0.0
    %551 = vmatprep.subr.mxu0 0.0
    %552 = vmatpush1.msra.mxu0 0.0
    %553 = vmatprep.subr.mxu0 0.0
    %554 = vmatpush1.msra.mxu0 0.0
    %555 = vmatprep.subr.mxu0 0.0
    %556 = vmatpush1.msra.mxu0 0.0
    %557 = vmatprep.subr.mxu0 0.0
    %558 = vmatpush1.msra.mxu0 0.0
    %559 = vmatprep.mubr.f32.mxu0 0.0
    %560 = vmatmul.mubr.f32.gmra.mrb[0].mxu0 %v490
    %v561 = vpop.f32.mrb[0].mxu0
    %v562 = vadd.f32 0.0, %v561
    %v563 = vpop.f32.mrb[0].mxu0
    %564 = vmatprep.mubr.f32.mxu0 0.0
    %565 = vmatmul.mubr.f32.gmra.mrb[0].mxu0 %v493
    %v566 = vpop.f32.mrb[0].mxu0
    %v567 = vadd.f32 0.0, %v566
    %v568 = vpop.f32.mrb[0].mxu0
    %569 = vdwg.mxu0
    %v570 = vadd.f32 %v147, %v562
    %v571 = vadd.f32 %v148, %v567
    %572 = vrot.lane.b32.xlu0 %v132, 120
    %v573 = vpop.permute.xlu0 %572
    %574 = vrot.lane.b32.xlu0 %v132, 88
    %v575 = vpop.permute.xlu0 %574
    %v576 = vsel %vm162, %v573, 0
    %v578 = vsel %vm162, %v575, 0
    %580 = vmatprep.subr.mxu0 0.0
    %581 = vmatpush1.xpose.msra.mxu0 %v578
    %582 = vmatprep.subr.mxu0 0.0
    %583 = vmatpush1.xpose.msra.mxu0 0.0
    %584 = vmatprep.subr.mxu0 0.0
    %585 = vmatpush1.xpose.msra.mxu0 0.0
    %586 = vmatprep.subr.mxu0 0.0
    %587 = vmatpush1.xpose.msra.mxu0 0.0
    %588 = vmatprep.subr.mxu0 0.0
    %589 = vmatpush1.xpose.msra.mxu0 0.0
    %590 = vmatprep.subr.mxu0 0.0
    %591 = vmatpush1.xpose.msra.mxu0 0.0
    %592 = vmatprep.subr.mxu0 0.0
    %593 = vmatpush1.xpose.msra.mxu0 0.0
    %594 = vmatprep.subr.mxu0 0.0
    %595 = vmatpush1.xpose.msra.mxu0 0.0
    %596 = vmatprep.subr.mxu0 0.0
    %597 = vmatpush1.xpose.msra.mxu0 0.0
    %598 = vmatprep.subr.mxu0 0.0
    %599 = vmatpush1.xpose.msra.mxu0 0.0
    %600 = vmatprep.subr.mxu0 0.0
    %601 = vmatpush1.xpose.msra.mxu0 0.0
    %602 = vmatprep.subr.mxu0 0.0
    %603 = vmatpush1.xpose.msra.mxu0 0.0
    %604 = vmatprep.subr.mxu0 0.0
    %605 = vmatpush1.xpose.msra.mxu0 0.0
    %606 = vmatprep.subr.mxu0 0.0
    %607 = vmatpush1.xpose.msra.mxu0 0.0
    %608 = vmatprep.subr.mxu0 0.0
    %609 = vmatpush1.xpose.msra.mxu0 0.0
    %610 = vmatprep.subr.mxu0 0.0
    %611 = vmatpush1.xpose.msra.mxu0 0.0
    %612 = vmatprep.subr.mxu0 0.0
    %613 = vmatpush1.xpose.msra.mxu0 0.0
    %614 = vmatprep.subr.mxu0 0.0
    %615 = vmatpush1.xpose.msra.mxu0 0.0
    %616 = vmatprep.subr.mxu0 0.0
    %617 = vmatpush1.xpose.msra.mxu0 0.0
    %618 = vmatprep.subr.mxu0 0.0
    %619 = vmatpush1.xpose.msra.mxu0 0.0
    %620 = vmatprep.subr.mxu0 0.0
    %621 = vmatpush1.xpose.msra.mxu0 0.0
    %622 = vmatprep.subr.mxu0 0.0
    %623 = vmatpush1.xpose.msra.mxu0 0.0
    %624 = vmatprep.subr.mxu0 0.0
    %625 = vmatpush1.xpose.msra.mxu0 0.0
    %626 = vmatprep.subr.mxu0 0.0
    %627 = vmatpush1.xpose.msra.mxu0 0.0
    %628 = vmatprep.subr.mxu0 0.0
    %629 = vmatpush1.xpose.msra.mxu0 0.0
    %630 = vmatprep.subr.mxu0 0.0
    %631 = vmatpush1.xpose.msra.mxu0 0.0
    %632 = vmatprep.subr.mxu0 0.0
    %633 = vmatpush1.xpose.msra.mxu0 0.0
    %634 = vmatprep.subr.mxu0 0.0
    %635 = vmatpush1.xpose.msra.mxu0 0.0
    %636 = vmatprep.subr.mxu0 0.0
    %637 = vmatpush1.xpose.msra.mxu0 0.0
    %638 = vmatprep.subr.mxu0 0.0
    %639 = vmatpush1.xpose.msra.mxu0 0.0
    %640 = vmatprep.subr.mxu0 0.0
    %641 = vmatpush1.xpose.msra.mxu0 0.0
    %642 = vmatprep.subr.mxu0 0.0
    %643 = vmatpush1.xpose.msra.mxu0 0.0
    %644 = vmatprep.mubr.f32.mxu0 0.0
    %645 = vmatmul.mubr.f32.gmra.mrb[0].mxu0 %v576
    %v646 = vpop.f32.mrb[0].mxu0
    %v647 = vadd.f32 %v152, %v646
    %v648 = vpop.f32.mrb[0].mxu0
    %649 = vdwg.mxu0
    %650 = vrot.lane.b32.xlu0 %v137, 120
    %v651 = vpop.permute.xlu0 %650
    %652 = vrot.lane.b32.xlu0 %v137, 88
    %v653 = vpop.permute.xlu0 %652
    %v654 = vsel %vm162, %v651, 0
    %v656 = vsel %vm162, %v653, 0
    %658 = vmatprep.subr.mxu0 0.0
    %659 = vmatpush1.xpose.msra.mxu0 %v656
    %660 = vmatprep.subr.mxu0 0.0
    %661 = vmatpush1.xpose.msra.mxu0 0.0
    %662 = vmatprep.subr.mxu0 0.0
    %663 = vmatpush1.xpose.msra.mxu0 0.0
    %664 = vmatprep.subr.mxu0 0.0
    %665 = vmatpush1.xpose.msra.mxu0 0.0
    %666 = vmatprep.subr.mxu0 0.0
    %667 = vmatpush1.xpose.msra.mxu0 0.0
    %668 = vmatprep.subr.mxu0 0.0
    %669 = vmatpush1.xpose.msra.mxu0 0.0
    %670 = vmatprep.subr.mxu0 0.0
    %671 = vmatpush1.xpose.msra.mxu0 0.0
    %672 = vmatprep.subr.mxu0 0.0
    %673 = vmatpush1.xpose.msra.mxu0 0.0
    %674 = vmatprep.subr.mxu0 0.0
    %675 = vmatpush1.xpose.msra.mxu0 0.0
    %676 = vmatprep.subr.mxu0 0.0
    %677 = vmatpush1.xpose.msra.mxu0 0.0
    %678 = vmatprep.subr.mxu0 0.0
    %679 = vmatpush1.xpose.msra.mxu0 0.0
    %680 = vmatprep.subr.mxu0 0.0
    %681 = vmatpush1.xpose.msra.mxu0 0.0
    %682 = vmatprep.subr.mxu0 0.0
    %683 = vmatpush1.xpose.msra.mxu0 0.0
    %684 = vmatprep.subr.mxu0 0.0
    %685 = vmatpush1.xpose.msra.mxu0 0.0
    %686 = vmatprep.subr.mxu0 0.0
    %687 = vmatpush1.xpose.msra.mxu0 0.0
    %688 = vmatprep.subr.mxu0 0.0
    %689 = vmatpush1.xpose.msra.mxu0 0.0
    %690 = vmatprep.subr.mxu0 0.0
    %691 = vmatpush1.xpose.msra.mxu0 0.0
    %692 = vmatprep.subr.mxu0 0.0
    %693 = vmatpush1.xpose.msra.mxu0 0.0
    %694 = vmatprep.subr.mxu0 0.0
    %695 = vmatpush1.xpose.msra.mxu0 0.0
    %696 = vmatprep.subr.mxu0 0.0
    %697 = vmatpush1.xpose.msra.mxu0 0.0
    %698 = vmatprep.subr.mxu0 0.0
    %699 = vmatpush1.xpose.msra.mxu0 0.0
    %700 = vmatprep.subr.mxu0 0.0
    %701 = vmatpush1.xpose.msra.mxu0 0.0
    %702 = vmatprep.subr.mxu0 0.0
    %703 = vmatpush1.xpose.msra.mxu0 0.0
    %704 = vmatprep.subr.mxu0 0.0
    %705 = vmatpush1.xpose.msra.mxu0 0.0
    %706 = vmatprep.subr.mxu0 0.0
    %707 = vmatpush1.xpose.msra.mxu0 0.0
    %708 = vmatprep.subr.mxu0 0.0
    %709 = vmatpush1.xpose.msra.mxu0 0.0
    %710 = vmatprep.subr.mxu0 0.0
    %711 = vmatpush1.xpose.msra.mxu0 0.0
    %712 = vmatprep.subr.mxu0 0.0
    %713 = vmatpush1.xpose.msra.mxu0 0.0
    %714 = vmatprep.subr.mxu0 0.0
    %715 = vmatpush1.xpose.msra.mxu0 0.0
    %716 = vmatprep.subr.mxu0 0.0
    %717 = vmatpush1.xpose.msra.mxu0 0.0
    %718 = vmatprep.subr.mxu0 0.0
    %719 = vmatpush1.xpose.msra.mxu0 0.0
    %720 = vmatprep.subr.mxu0 0.0
    %721 = vmatpush1.xpose.msra.mxu0 0.0
    %722 = vmatprep.mubr.f32.mxu0 0.0
    %723 = vmatmul.mubr.f32.gmra.mrb[0].mxu0 %v654
    %v724 = vpop.f32.mrb[0].mxu0
    %v725 = vadd.f32 %v156, %v724
    %v726 = vpop.f32.mrb[0].mxu0
    %727 = vdwg.mxu0
    %v728 = vsel %vm162, %v647, -inf
    %729 = vmax.xlane.f32.xlu0 %v728
    %v730 = vpop.xlane.xlu0 %729
    %v731 = vsel %vm162, %v725, -inf
    %732 = vmax.xlane.f32.xlu0 %v731
    %v733 = vpop.xlane.xlu0 %732
    %v734 = vsub.f32 %v647, %v730
    %v735 = vsub.f32 %v725, %v733
    %v736 = vmul.f32 %v734, 1.442695
    %v737 = vpow.pop %v736
    %v738 = vmul.f32 %v735, 1.442695
    %v739 = vpow.pop %v738
    %v740 = vsel %vm162, %v737, 0.0
    %741 = vadd.xlane.f32.xlu0 %v740
    %v742 = vpop.xlane.xlu0 %741
    %v743 = vsel %vm162, %v739, 0.0
    %744 = vadd.xlane.f32.xlu0 %v743
    %v745 = vpop.xlane.xlu0 %744
    %v746 = vrcp.pop %v742
    %v747 = vrcp.pop %v745
    %v748 = vmul.f32 %v737, %v746
    %v749 = vmul.f32 %v739, %v747
    %750 = vrot.lane.b32.xlu0 %v132, 56
    %v751 = vpop.permute.xlu0 %750
    %v754 = vsel %vm162, %v748, 0
    %756 = vmatprep.subr.mxu0 0.0
    %757 = vmatpush1.msra.mxu0 %v751
    %758 = vmatprep.subr.mxu0 0.0
    %759 = vmatpush1.msra.mxu0 0.0
    %760 = vmatprep.subr.mxu0 0.0
    %761 = vmatpush1.msra.mxu0 0.0
    %762 = vmatprep.subr.mxu0 0.0
    %763 = vmatpush1.msra.mxu0 0.0
    %764 = vmatprep.subr.mxu0 0.0
    %765 = vmatpush1.msra.mxu0 0.0
    %766 = vmatprep.subr.mxu0 0.0
    %767 = vmatpush1.msra.mxu0 0.0
    %768 = vmatprep.subr.mxu0 0.0
    %769 = vmatpush1.msra.mxu0 0.0
    %770 = vmatprep.subr.mxu0 0.0
    %771 = vmatpush1.msra.mxu0 0.0
    %772 = vmatprep.subr.mxu0 0.0
    %773 = vmatpush1.msra.mxu0 0.0
    %774 = vmatprep.subr.mxu0 0.0
    %775 = vmatpush1.msra.mxu0 0.0
    %776 = vmatprep.subr.mxu0 0.0
    %777 = vmatpush1.msra.mxu0 0.0
    %778 = vmatprep.subr.mxu0 0.0
    %779 = vmatpush1.msra.mxu0 0.0
    %780 = vmatprep.subr.mxu0 0.0
    %781 = vmatpush1.msra.mxu0 0.0
    %782 = vmatprep.subr.mxu0 0.0
    %783 = vmatpush1.msra.mxu0 0.0
    %784 = vmatprep.subr.mxu0 0.0
    %785 = vmatpush1.msra.mxu0 0.0
    %786 = vmatprep.subr.mxu0 0.0
    %787 = vmatpush1.msra.mxu0 0.0
    %788 = vmatprep.subr.mxu0 0.0
    %789 = vmatpush1.msra.mxu0 0.0
    %790 = vmatprep.subr.mxu0 0.0
    %791 = vmatpush1.msra.mxu0 0.0
    %792 = vmatprep.subr.mxu0 0.0
    %793 = vmatpush1.msra.mxu0 0.0
    %794 = vmatprep.subr.mxu0 0.0
    %795 = vmatpush1.msra.mxu0 0.0
    %796 = vmatprep.subr.mxu0 0.0
    %797 = vmatpush1.msra.mxu0 0.0
    %798 = vmatprep.subr.mxu0 0.0
    %799 = vmatpush1.msra.mxu0 0.0
    %800 = vmatprep.subr.mxu0 0.0
    %801 = vmatpush1.msra.mxu0 0.0
    %802 = vmatprep.subr.mxu0 0.0
    %803 = vmatpush1.msra.mxu0 0.0
    %804 = vmatprep.subr.mxu0 0.0
    %805 = vmatpush1.msra.mxu0 0.0
    %806 = vmatprep.subr.mxu0 0.0
    %807 = vmatpush1.msra.mxu0 0.0
    %808 = vmatprep.subr.mxu0 0.0
    %809 = vmatpush1.msra.mxu0 0.0
    %810 = vmatprep.subr.mxu0 0.0
    %811 = vmatpush1.msra.mxu0 0.0
    %812 = vmatprep.subr.mxu0 0.0
    %813 = vmatpush1.msra.mxu0 0.0
    %814 = vmatprep.subr.mxu0 0.0
    %815 = vmatpush1.msra.mxu0 0.0
    %816 = vmatprep.subr.mxu0 0.0
    %817 = vmatpush1.msra.mxu0 0.0
    %818 = vmatprep.subr.mxu0 0.0
    %819 = vmatpush1.msra.mxu0 0.0
    %820 = vmatprep.mubr.f32.mxu0 0.0
    %821 = vmatmul.mubr.f32.gmra.mrb[0].mxu0 %v754
    %v822 = vpop.f32.mrb[0].mxu0
    %v823 = vadd.f32 0.0, %v822
    %v824 = vpop.f32.mrb[0].mxu0
    %825 = vdwg.mxu0
    %826 = vrot.lane.b32.xlu0 %v137, 56
    %v827 = vpop.permute.xlu0 %826
    %v830 = vsel %vm162, %v749, 0
    %832 = vmatprep.subr.mxu0 0.0
    %833 = vmatpush1.msra.mxu0 %v827
    %834 = vmatprep.subr.mxu0 0.0
    %835 = vmatpush1.msra.mxu0 0.0
    %836 = vmatprep.subr.mxu0 0.0
    %837 = vmatpush1.msra.mxu0 0.0
    %838 = vmatprep.subr.mxu0 0.0
    %839 = vmatpush1.msra.mxu0 0.0
    %840 = vmatprep.subr.mxu0 0.0
    %841 = vmatpush1.msra.mxu0 0.0
    %842 = vmatprep.subr.mxu0 0.0
    %843 = vmatpush1.msra.mxu0 0.0
    %844 = vmatprep.subr.mxu0 0.0
    %845 = vmatpush1.msra.mxu0 0.0
    %846 = vmatprep.subr.mxu0 0.0
    %847 = vmatpush1.msra.mxu0 0.0
    %848 = vmatprep.subr.mxu0 0.0
    %849 = vmatpush1.msra.mxu0 0.0
    %850 = vmatprep.subr.mxu0 0.0
    %851 = vmatpush1.msra.mxu0 0.0
    %852 = vmatprep.subr.mxu0 0.0
    %853 = vmatpush1.msra.mxu0 0.0
    %854 = vmatprep.subr.mxu0 0.0
    %855 = vmatpush1.msra.mxu0 0.0
    %856 = vmatprep.subr.mxu0 0.0
    %857 = vmatpush1.msra.mxu0 0.0
    %858 = vmatprep.subr.mxu0 0.0
    %859 = vmatpush1.msra.mxu0 0.0
    %860 = vmatprep.subr.mxu0 0.0
    %861 = vmatpush1.msra.mxu0 0.0
    %862 = vmatprep.subr.mxu0 0.0
    %863 = vmatpush1.msra.mxu0 0.0
    %864 = vmatprep.subr.mxu0 0.0
    %865 = vmatpush1.msra.mxu0 0.0
    %866 = vmatprep.subr.mxu0 0.0
    %867 = vmatpush1.msra.mxu0 0.0
    %868 = vmatprep.subr.mxu0 0.0
    %869 = vmatpush1.msra.mxu0 0.0
    %870 = vmatprep.subr.mxu0 0.0
    %871 = vmatpush1.msra.mxu0 0.0
    %872 = vmatprep.subr.mxu0 0.0
    %873 = vmatpush1.msra.mxu0 0.0
    %874 = vmatprep.subr.mxu0 0.0
    %875 = vmatpush1.msra.mxu0 0.0
    %876 = vmatprep.subr.mxu0 0.0
    %877 = vmatpush1.msra.mxu0 0.0
    %878 = vmatprep.subr.mxu0 0.0
    %879 = vmatpush1.msra.mxu0 0.0
    %880 = vmatprep.subr.mxu0 0.0
    %881 = vmatpush1.msra.mxu0 0.0
    %882 = vmatprep.subr.mxu0 0.0
    %883 = vmatpush1.msra.mxu0 0.0
    %884 = vmatprep.subr.mxu0 0.0
    %885 = vmatpush1.msra.mxu0 0.0
    %886 = vmatprep.subr.mxu0 0.0
    %887 = vmatpush1.msra.mxu0 0.0
    %888 = vmatprep.subr.mxu0 0.0
    %889 = vmatpush1.msra.mxu0 0.0
    %890 = vmatprep.subr.mxu0 0.0
    %891 = vmatpush1.msra.mxu0 0.0
    %892 = vmatprep.subr.mxu0 0.0
    %893 = vmatpush1.msra.mxu0 0.0
    %894 = vmatprep.subr.mxu0 0.0
    %895 = vmatpush1.msra.mxu0 0.0
    %896 = vmatprep.mubr.f32.mxu0 0.0
    %897 = vmatmul.mubr.f32.gmra.mrb[0].mxu0 %v830
    %v898 = vpop.f32.mrb[0].mxu0
    %v899 = vadd.f32 0.0, %v898
    %v900 = vpop.f32.mrb[0].mxu0
    %901 = vdwg.mxu0
    %v902 = vld [vmem:[%s3 + $0x8] sm:$0xff]
    %v904 = vsel %vm162, %v823, 0
    %v907 = vsel %vm162, %v899, 0
    %909 = vmatprep.subr.mxu0 0.0
    %910 = vmatpush1.msra.mxu0 %v902
    %911 = vmatprep.subr.mxu0 0.0
    %912 = vmatpush1.msra.mxu0 0.0
    %913 = vmatprep.subr.mxu0 0.0
    %914 = vmatpush1.msra.mxu0 0.0
    %915 = vmatprep.subr.mxu0 0.0
    %916 = vmatpush1.msra.mxu0 0.0
    %917 = vmatprep.subr.mxu0 0.0
    %918 = vmatpush1.msra.mxu0 0.0
    %919 = vmatprep.subr.mxu0 0.0
    %920 = vmatpush1.msra.mxu0 0.0
    %921 = vmatprep.subr.mxu0 0.0
    %922 = vmatpush1.msra.mxu0 0.0
    %923 = vmatprep.subr.mxu0 0.0
    %924 = vmatpush1.msra.mxu0 0.0
    %925 = vmatprep.subr.mxu0 0.0
    %926 = vmatpush1.msra.mxu0 0.0
    %927 = vmatprep.subr.mxu0 0.0
    %928 = vmatpush1.msra.mxu0 0.0
    %929 = vmatprep.subr.mxu0 0.0
    %930 = vmatpush1.msra.mxu0 0.0
    %931 = vmatprep.subr.mxu0 0.0
    %932 = vmatpush1.msra.mxu0 0.0
    %933 = vmatprep.subr.mxu0 0.0
    %934 = vmatpush1.msra.mxu0 0.0
    %935 = vmatprep.subr.mxu0 0.0
    %936 = vmatpush1.msra.mxu0 0.0
    %937 = vmatprep.subr.mxu0 0.0
    %938 = vmatpush1.msra.mxu0 0.0
    %939 = vmatprep.subr.mxu0 0.0
    %940 = vmatpush1.msra.mxu0 0.0
    %941 = vmatprep.subr.mxu0 0.0
    %942 = vmatpush1.msra.mxu0 0.0
    %943 = vmatprep.subr.mxu0 0.0
    %944 = vmatpush1.msra.mxu0 0.0
    %945 = vmatprep.subr.mxu0 0.0
    %946 = vmatpush1.msra.mxu0 0.0
    %947 = vmatprep.subr.mxu0 0.0
    %948 = vmatpush1.msra.mxu0 0.0
    %949 = vmatprep.subr.mxu0 0.0
    %950 = vmatpush1.msra.mxu0 0.0
    %951 = vmatprep.subr.mxu0 0.0
    %952 = vmatpush1.msra.mxu0 0.0
    %953 = vmatprep.subr.mxu0 0.0
    %954 = vmatpush1.msra.mxu0 0.0
    %955 = vmatprep.subr.mxu0 0.0
    %956 = vmatpush1.msra.mxu0 0.0
    %957 = vmatprep.subr.mxu0 0.0
    %958 = vmatpush1.msra.mxu0 0.0
    %959 = vmatprep.subr.mxu0 0.0
    %960 = vmatpush1.msra.mxu0 0.0
    %961 = vmatprep.subr.mxu0 0.0
    %962 = vmatpush1.msra.mxu0 0.0
    %963 = vmatprep.subr.mxu0 0.0
    %964 = vmatpush1.msra.mxu0 0.0
    %965 = vmatprep.subr.mxu0 0.0
    %966 = vmatpush1.msra.mxu0 0.0
    %967 = vmatprep.subr.mxu0 0.0
    %968 = vmatpush1.msra.mxu0 0.0
    %969 = vmatprep.subr.mxu0 0.0
    %970 = vmatpush1.msra.mxu0 0.0
    %971 = vmatprep.subr.mxu0 0.0
    %972 = vmatpush1.msra.mxu0 0.0
    %973 = vmatprep.mubr.f32.mxu0 0.0
    %974 = vmatmul.mubr.f32.gmra.mrb[0].mxu0 %v904
    %v975 = vpop.f32.mrb[0].mxu0
    %v976 = vadd.f32 0.0, %v975
    %v977 = vpop.f32.mrb[0].mxu0
    %978 = vmatprep.mubr.f32.mxu0 0.0
    %979 = vmatmul.mubr.f32.gmra.mrb[0].mxu0 %v907
    %v980 = vpop.f32.mrb[0].mxu0
    %v981 = vadd.f32 0.0, %v980
    %v982 = vpop.f32.mrb[0].mxu0
    %983 = vdwg.mxu0
    %v984 = vadd.f32 %v570, %v976
    %v985 = vadd.f32 %v571, %v981
    %986 = vrot.lane.b32.xlu0 %v132, 112
    %v987 = vpop.permute.xlu0 %986
    %988 = vrot.lane.b32.xlu0 %v132, 80
    %v989 = vpop.permute.xlu0 %988
    %v990 = vsel %vm162, %v987, 0
    %v992 = vsel %vm162, %v989, 0
    %994 = vmatprep.subr.mxu0 0.0
    %995 = vmatpush1.xpose.msra.mxu0 %v992
    %996 = vmatprep.subr.mxu0 0.0
    %997 = vmatpush1.xpose.msra.mxu0 0.0
    %998 = vmatprep.subr.mxu0 0.0
    %999 = vmatpush1.xpose.msra.mxu0 0.0
    %1000 = vmatprep.subr.mxu0 0.0
    %1001 = vmatpush1.xpose.msra.mxu0 0.0
    %1002 = vmatprep.subr.mxu0 0.0
    %1003 = vmatpush1.xpose.msra.mxu0 0.0
    %1004 = vmatprep.subr.mxu0 0.0
    %1005 = vmatpush1.xpose.msra.mxu0 0.0
    %1006 = vmatprep.subr.mxu0 0.0
    %1007 = vmatpush1.xpose.msra.mxu0 0.0
    %1008 = vmatprep.subr.mxu0 0.0
    %1009 = vmatpush1.xpose.msra.mxu0 0.0
    %1010 = vmatprep.subr.mxu0 0.0
    %1011 = vmatpush1.xpose.msra.mxu0 0.0
    %1012 = vmatprep.subr.mxu0 0.0
    %1013 = vmatpush1.xpose.msra.mxu0 0.0
    %1014 = vmatprep.subr.mxu0 0.0
    %1015 = vmatpush1.xpose.msra.mxu0 0.0
    %1016 = vmatprep.subr.mxu0 0.0
    %1017 = vmatpush1.xpose.msra.mxu0 0.0
    %1018 = vmatprep.subr.mxu0 0.0
    %1019 = vmatpush1.xpose.msra.mxu0 0.0
    %1020 = vmatprep.subr.mxu0 0.0
    %1021 = vmatpush1.xpose.msra.mxu0 0.0
    %1022 = vmatprep.subr.mxu0 0.0
    %1023 = vmatpush1.xpose.msra.mxu0 0.0
    %1024 = vmatprep.subr.mxu0 0.0
    %1025 = vmatpush1.xpose.msra.mxu0 0.0
    %1026 = vmatprep.subr.mxu0 0.0
    %1027 = vmatpush1.xpose.msra.mxu0 0.0
    %1028 = vmatprep.subr.mxu0 0.0
    %1029 = vmatpush1.xpose.msra.mxu0 0.0
    %1030 = vmatprep.subr.mxu0 0.0
    %1031 = vmatpush1.xpose.msra.mxu0 0.0
    %1032 = vmatprep.subr.mxu0 0.0
    %1033 = vmatpush1.xpose.msra.mxu0 0.0
    %1034 = vmatprep.subr.mxu0 0.0
    %1035 = vmatpush1.xpose.msra.mxu0 0.0
    %1036 = vmatprep.subr.mxu0 0.0
    %1037 = vmatpush1.xpose.msra.mxu0 0.0
    %1038 = vmatprep.subr.mxu0 0.0
    %1039 = vmatpush1.xpose.msra.mxu0 0.0
    %1040 = vmatprep.subr.mxu0 0.0
    %1041 = vmatpush1.xpose.msra.mxu0 0.0
    %1042 = vmatprep.subr.mxu0 0.0
    %1043 = vmatpush1.xpose.msra.mxu0 0.0
    %1044 = vmatprep.subr.mxu0 0.0
    %1045 = vmatpush1.xpose.msra.mxu0 0.0
    %1046 = vmatprep.subr.mxu0 0.0
    %1047 = vmatpush1.xpose.msra.mxu0 0.0
    %1048 = vmatprep.subr.mxu0 0.0
    %1049 = vmatpush1.xpose.msra.mxu0 0.0
    %1050 = vmatprep.subr.mxu0 0.0
    %1051 = vmatpush1.xpose.msra.mxu0 0.0
    %1052 = vmatprep.subr.mxu0 0.0
    %1053 = vmatpush1.xpose.msra.mxu0 0.0
    %1054 = vmatprep.subr.mxu0 0.0
    %1055 = vmatpush1.xpose.msra.mxu0 0.0
    %1056 = vmatprep.subr.mxu0 0.0
    %1057 = vmatpush1.xpose.msra.mxu0 0.0
    %1058 = vmatprep.mubr.f32.mxu0 0.0
    %1059 = vmatmul.mubr.f32.gmra.mrb[0].mxu0 %v990
    %v1060 = vpop.f32.mrb[0].mxu0
    %v1061 = vadd.f32 %v152, %v1060
    %v1062 = vpop.f32.mrb[0].mxu0
    %1063 = vdwg.mxu0
    %1064 = vrot.lane.b32.xlu0 %v137, 112
    %v1065 = vpop.permute.xlu0 %1064
    %1066 = vrot.lane.b32.xlu0 %v137, 80
    %v1067 = vpop.permute.xlu0 %1066
    %v1068 = vsel %vm162, %v1065, 0
    %v1070 = vsel %vm162, %v1067, 0
    %1072 = vmatprep.subr.mxu0 0.0
    %1073 = vmatpush1.xpose.msra.mxu0 %v1070
    %1074 = vmatprep.subr.mxu0 0.0
    %1075 = vmatpush1.xpose.msra.mxu0 0.0
    %1076 = vmatprep.subr.mxu0 0.0
    %1077 = vmatpush1.xpose.msra.mxu0 0.0
    %1078 = vmatprep.subr.mxu0 0.0
    %1079 = vmatpush1.xpose.msra.mxu0 0.0
    %1080 = vmatprep.subr.mxu0 0.0
    %1081 = vmatpush1.xpose.msra.mxu0 0.0
    %1082 = vmatprep.subr.mxu0 0.0
    %1083 = vmatpush1.xpose.msra.mxu0 0.0
    %1084 = vmatprep.subr.mxu0 0.0
    %1085 = vmatpush1.xpose.msra.mxu0 0.0
    %1086 = vmatprep.subr.mxu0 0.0
    %1087 = vmatpush1.xpose.msra.mxu0 0.0
    %1088 = vmatprep.subr.mxu0 0.0
    %1089 = vmatpush1.xpose.msra.mxu0 0.0
    %1090 = vmatprep.subr.mxu0 0.0
    %1091 = vmatpush1.xpose.msra.mxu0 0.0
    %1092 = vmatprep.subr.mxu0 0.0
    %1093 = vmatpush1.xpose.msra.mxu0 0.0
    %1094 = vmatprep.subr.mxu0 0.0
    %1095 = vmatpush1.xpose.msra.mxu0 0.0
    %1096 = vmatprep.subr.mxu0 0.0
    %1097 = vmatpush1.xpose.msra.mxu0 0.0
    %1098 = vmatprep.subr.mxu0 0.0
    %1099 = vmatpush1.xpose.msra.mxu0 0.0
    %1100 = vmatprep.subr.mxu0 0.0
    %1101 = vmatpush1.xpose.msra.mxu0 0.0
    %1102 = vmatprep.subr.mxu0 0.0
    %1103 = vmatpush1.xpose.msra.mxu0 0.0
    %1104 = vmatprep.subr.mxu0 0.0
    %1105 = vmatpush1.xpose.msra.mxu0 0.0
    %1106 = vmatprep.subr.mxu0 0.0
    %1107 = vmatpush1.xpose.msra.mxu0 0.0
    %1108 = vmatprep.subr.mxu0 0.0
    %1109 = vmatpush1.xpose.msra.mxu0 0.0
    %1110 = vmatprep.subr.mxu0 0.0
    %1111 = vmatpush1.xpose.msra.mxu0 0.0
    %1112 = vmatprep.subr.mxu0 0.0
    %1113 = vmatpush1.xpose.msra.mxu0 0.0
    %1114 = vmatprep.subr.mxu0 0.0
    %1115 = vmatpush1.xpose.msra.mxu0 0.0
    %1116 = vmatprep.subr.mxu0 0.0
    %1117 = vmatpush1.xpose.msra.mxu0 0.0
    %1118 = vmatprep.subr.mxu0 0.0
    %1119 = vmatpush1.xpose.msra.mxu0 0.0
    %1120 = vmatprep.subr.mxu0 0.0
    %1121 = vmatpush1.xpose.msra.mxu0 0.0
    %1122 = vmatprep.subr.mxu0 0.0
    %1123 = vmatpush1.xpose.msra.mxu0 0.0
    %1124 = vmatprep.subr.mxu0 0.0
    %1125 = vmatpush1.xpose.msra.mxu0 0.0
    %1126 = vmatprep.subr.mxu0 0.0
    %1127 = vmatpush1.xpose.msra.mxu0 0.0
    %1128 = vmatprep.subr.mxu0 0.0
    %1129 = vmatpush1.xpose.msra.mxu0 0.0
    %1130 = vmatprep.subr.mxu0 0.0
    %1131 = vmatpush1.xpose.msra.mxu0 0.0
    %1132 = vmatprep.subr.mxu0 0.0
    %1133 = vmatpush1.xpose.msra.mxu0 0.0
    %1134 = vmatprep.subr.mxu0 0.0
    %1135 = vmatpush1.xpose.msra.mxu0 0.0
    %1136 = vmatprep.mubr.f32.mxu0 0.0
    %1137 = vmatmul.mubr.f32.gmra.mrb[0].mxu0 %v1068
    %v1138 = vpop.f32.mrb[0].mxu0
    %v1139 = vadd.f32 %v156, %v1138
    %v1140 = vpop.f32.mrb[0].mxu0
    %1141 = vdwg.mxu0
    %v1142 = vsel %vm162, %v1061, -inf
    %1143 = vmax.xlane.f32.xlu0 %v1142
    %v1144 = vpop.xlane.xlu0 %1143
    %v1145 = vsel %vm162, %v1139, -inf
    %1146 = vmax.xlane.f32.xlu0 %v1145
    %v1147 = vpop.xlane.xlu0 %1146
    %v1148 = vsub.f32 %v1061, %v1144
    %v1149 = vsub.f32 %v1139, %v1147
    %v1150 = vmul.f32 %v1148, 1.442695
    %v1151 = vpow.pop %v1150
    %v1152 = vmul.f32 %v1149, 1.442695
    %v1153 = vpow.pop %v1152
    %v1154 = vsel %vm162, %v1151, 0.0
    %1155 = vadd.xlane.f32.xlu0 %v1154
    %v1156 = vpop.xlane.xlu0 %1155
    %v1157 = vsel %vm162, %v1153, 0.0
    %1158 = vadd.xlane.f32.xlu0 %v1157
    %v1159 = vpop.xlane.xlu0 %1158
    %v1160 = vrcp.pop %v1156
    %v1161 = vrcp.pop %v1159
    %v1162 = vmul.f32 %v1151, %v1160
    %v1163 = vmul.f32 %v1153, %v1161
    %1164 = vrot.lane.b32.xlu0 %v132, 48
    %v1165 = vpop.permute.xlu0 %1164
    %v1168 = vsel %vm162, %v1162, 0
    %1170 = vmatprep.subr.mxu0 0.0
    %1171 = vmatpush1.msra.mxu0 %v1165
    %1172 = vmatprep.subr.mxu0 0.0
    %1173 = vmatpush1.msra.mxu0 0.0
    %1174 = vmatprep.subr.mxu0 0.0
    %1175 = vmatpush1.msra.mxu0 0.0
    %1176 = vmatprep.subr.mxu0 0.0
    %1177 = vmatpush1.msra.mxu0 0.0
    %1178 = vmatprep.subr.mxu0 0.0
    %1179 = vmatpush1.msra.mxu0 0.0
    %1180 = vmatprep.subr.mxu0 0.0
    %1181 = vmatpush1.msra.mxu0 0.0
    %1182 = vmatprep.subr.mxu0 0.0
    %1183 = vmatpush1.msra.mxu0 0.0
    %1184 = vmatprep.subr.mxu0 0.0
    %1185 = vmatpush1.msra.mxu0 0.0
    %1186 = vmatprep.subr.mxu0 0.0
    %1187 = vmatpush1.msra.mxu0 0.0
    %1188 = vmatprep.subr.mxu0 0.0
    %1189 = vmatpush1.msra.mxu0 0.0
    %1190 = vmatprep.subr.mxu0 0.0
    %1191 = vmatpush1.msra.mxu0 0.0
    %1192 = vmatprep.subr.mxu0 0.0
    %1193 = vmatpush1.msra.mxu0 0.0
    %1194 = vmatprep.subr.mxu0 0.0
    %1195 = vmatpush1.msra.mxu0 0.0
    %1196 = vmatprep.subr.mxu0 0.0
    %1197 = vmatpush1.msra.mxu0 0.0
    %1198 = vmatprep.subr.mxu0 0.0
    %1199 = vmatpush1.msra.mxu0 0.0
    %1200 = vmatprep.subr.mxu0 0.0
    %1201 = vmatpush1.msra.mxu0 0.0
    %1202 = vmatprep.subr.mxu0 0.0
    %1203 = vmatpush1.msra.mxu0 0.0
    %1204 = vmatprep.subr.mxu0 0.0
    %1205 = vmatpush1.msra.mxu0 0.0
    %1206 = vmatprep.subr.mxu0 0.0
    %1207 = vmatpush1.msra.mxu0 0.0
    %1208 = vmatprep.subr.mxu0 0.0
    %1209 = vmatpush1.msra.mxu0 0.0
    %1210 = vmatprep.subr.mxu0 0.0
    %1211 = vmatpush1.msra.mxu0 0.0
    %1212 = vmatprep.subr.mxu0 0.0
    %1213 = vmatpush1.msra.mxu0 0.0
    %1214 = vmatprep.subr.mxu0 0.0
    %1215 = vmatpush1.msra.mxu0 0.0
    %1216 = vmatprep.subr.mxu0 0.0
    %1217 = vmatpush1.msra.mxu0 0.0
    %1218 = vmatprep.subr.mxu0 0.0
    %1219 = vmatpush1.msra.mxu0 0.0
    %1220 = vmatprep.subr.mxu0 0.0
    %1221 = vmatpush1.msra.mxu0 0.0
    %1222 = vmatprep.subr.mxu0 0.0
    %1223 = vmatpush1.msra.mxu0 0.0
    %1224 = vmatprep.subr.mxu0 0.0
    %1225 = vmatpush1.msra.mxu0 0.0
    %1226 = vmatprep.subr.mxu0 0.0
    %1227 = vmatpush1.msra.mxu0 0.0
    %1228 = vmatprep.subr.mxu0 0.0
    %1229 = vmatpush1.msra.mxu0 0.0
    %1230 = vmatprep.subr.mxu0 0.0
    %1231 = vmatpush1.msra.mxu0 0.0
    %1232 = vmatprep.subr.mxu0 0.0
    %1233 = vmatpush1.msra.mxu0 0.0
    %1234 = vmatprep.mubr.f32.mxu0 0.0
    %1235 = vmatmul.mubr.f32.gmra.mrb[0].mxu0 %v1168
    %v1236 = vpop.f32.mrb[0].mxu0
    %v1237 = vadd.f32 0.0, %v1236
    %v1238 = vpop.f32.mrb[0].mxu0
    %1239 = vdwg.mxu0
    %1240 = vrot.lane.b32.xlu0 %v137, 48
    %v1241 = vpop.permute.xlu0 %1240
    %v1244 = vsel %vm162, %v1163, 0
    %1246 = vmatprep.subr.mxu0 0.0
    %1247 = vmatpush1.msra.mxu0 %v1241
    %1248 = vmatprep.subr.mxu0 0.0
    %1249 = vmatpush1.msra.mxu0 0.0
    %1250 = vmatprep.subr.mxu0 0.0
    %1251 = vmatpush1.msra.mxu0 0.0
    %1252 = vmatprep.subr.mxu0 0.0
    %1253 = vmatpush1.msra.mxu0 0.0
    %1254 = vmatprep.subr.mxu0 0.0
    %1255 = vmatpush1.msra.mxu0 0.0
    %1256 = vmatprep.subr.mxu0 0.0
    %1257 = vmatpush1.msra.mxu0 0.0
    %1258 = vmatprep.subr.mxu0 0.0
    %1259 = vmatpush1.msra.mxu0 0.0
    %1260 = vmatprep.subr.mxu0 0.0
    %1261 = vmatpush1.msra.mxu0 0.0
    %1262 = vmatprep.subr.mxu0 0.0
    %1263 = vmatpush1.msra.mxu0 0.0
    %1264 = vmatprep.subr.mxu0 0.0
    %1265 = vmatpush1.msra.mxu0 0.0
    %1266 = vmatprep.subr.mxu0 0.0
    %1267 = vmatpush1.msra.mxu0 0.0
    %1268 = vmatprep.subr.mxu0 0.0
    %1269 = vmatpush1.msra.mxu0 0.0
    %1270 = vmatprep.subr.mxu0 0.0
    %1271 = vmatpush1.msra.mxu0 0.0
    %1272 = vmatprep.subr.mxu0 0.0
    %1273 = vmatpush1.msra.mxu0 0.0
    %1274 = vmatprep.subr.mxu0 0.0
    %1275 = vmatpush1.msra.mxu0 0.0
    %1276 = vmatprep.subr.mxu0 0.0
    %1277 = vmatpush1.msra.mxu0 0.0
    %1278 = vmatprep.subr.mxu0 0.0
    %1279 = vmatpush1.msra.mxu0 0.0
    %1280 = vmatprep.subr.mxu0 0.0
    %1281 = vmatpush1.msra.mxu0 0.0
    %1282 = vmatprep.subr.mxu0 0.0
    %1283 = vmatpush1.msra.mxu0 0.0
    %1284 = vmatprep.subr.mxu0 0.0
    %1285 = vmatpush1.msra.mxu0 0.0
    %1286 = vmatprep.subr.mxu0 0.0
    %1287 = vmatpush1.msra.mxu0 0.0
    %1288 = vmatprep.subr.mxu0 0.0
    %1289 = vmatpush1.msra.mxu0 0.0
    %1290 = vmatprep.subr.mxu0 0.0
    %1291 = vmatpush1.msra.mxu0 0.0
    %1292 = vmatprep.subr.mxu0 0.0
    %1293 = vmatpush1.msra.mxu0 0.0
    %1294 = vmatprep.subr.mxu0 0.0
    %1295 = vmatpush1.msra.mxu0 0.0
    %1296 = vmatprep.subr.mxu0 0.0
    %1297 = vmatpush1.msra.mxu0 0.0
    %1298 = vmatprep.subr.mxu0 0.0
    %1299 = vmatpush1.msra.mxu0 0.0
    %1300 = vmatprep.subr.mxu0 0.0
    %1301 = vmatpush1.msra.mxu0 0.0
    %1302 = vmatprep.subr.mxu0 0.0
    %1303 = vmatpush1.msra.mxu0 0.0
    %1304 = vmatprep.subr.mxu0 0.0
    %1305 = vmatpush1.msra.mxu0 0.0
    %1306 = vmatprep.subr.mxu0 0.0
    %1307 = vmatpush1.msra.mxu0 0.0
    %1308 = vmatprep.subr.mxu0 0.0
    %1309 = vmatpush1.msra.mxu0 0.0
    %1310 = vmatprep.mubr.f32.mxu0 0.0
    %1311 = vmatmul.mubr.f32.gmra.mrb[0].mxu0 %v1244
    %v1312 = vpop.f32.mrb[0].mxu0
    %v1313 = vadd.f32 0.0, %v1312
    %v1314 = vpop.f32.mrb[0].mxu0
    %1315 = vdwg.mxu0
    %v1316 = vld [vmem:[%s3 + $0x10] sm:$0xff]
    %v1318 = vsel %vm162, %v1237, 0
    %v1321 = vsel %vm162, %v1313, 0
    %1323 = vmatprep.subr.mxu0 0.0
    %1324 = vmatpush1.msra.mxu0 %v1316
    %1325 = vmatprep.subr.mxu0 0.0
    %1326 = vmatpush1.msra.mxu0 0.0
    %1327 = vmatprep.subr.mxu0 0.0
    %1328 = vmatpush1.msra.mxu0 0.0
    %1329 = vmatprep.subr.mxu0 0.0
    %1330 = vmatpush1.msra.mxu0 0.0
    %1331 = vmatprep.subr.mxu0 0.0
    %1332 = vmatpush1.msra.mxu0 0.0
    %1333 = vmatprep.subr.mxu0 0.0
    %1334 = vmatpush1.msra.mxu0 0.0
    %1335 = vmatprep.subr.mxu0 0.0
    %1336 = vmatpush1.msra.mxu0 0.0
    %1337 = vmatprep.subr.mxu0 0.0
    %1338 = vmatpush1.msra.mxu0 0.0
    %1339 = vmatprep.subr.mxu0 0.0
    %1340 = vmatpush1.msra.mxu0 0.0
    %1341 = vmatprep.subr.mxu0 0.0
    %1342 = vmatpush1.msra.mxu0 0.0
    %1343 = vmatprep.subr.mxu0 0.0
    %1344 = vmatpush1.msra.mxu0 0.0
    %1345 = vmatprep.subr.mxu0 0.0
    %1346 = vmatpush1.msra.mxu0 0.0
    %1347 = vmatprep.subr.mxu0 0.0
    %1348 = vmatpush1.msra.mxu0 0.0
    %1349 = vmatprep.subr.mxu0 0.0
    %1350 = vmatpush1.msra.mxu0 0.0
    %1351 = vmatprep.subr.mxu0 0.0
    %1352 = vmatpush1.msra.mxu0 0.0
    %1353 = vmatprep.subr.mxu0 0.0
    %1354 = vmatpush1.msra.mxu0 0.0
    %1355 = vmatprep.subr.mxu0 0.0
    %1356 = vmatpush1.msra.mxu0 0.0
    %1357 = vmatprep.subr.mxu0 0.0
    %1358 = vmatpush1.msra.mxu0 0.0
    %1359 = vmatprep.subr.mxu0 0.0
    %1360 = vmatpush1.msra.mxu0 0.0
    %1361 = vmatprep.subr.mxu0 0.0
    %1362 = vmatpush1.msra.mxu0 0.0
    %1363 = vmatprep.subr.mxu0 0.0
    %1364 = vmatpush1.msra.mxu0 0.0
    %1365 = vmatprep.subr.mxu0 0.0
    %1366 = vmatpush1.msra.mxu0 0.0
    %1367 = vmatprep.subr.mxu0 0.0
    %1368 = vmatpush1.msra.mxu0 0.0
    %1369 = vmatprep.subr.mxu0 0.0
    %1370 = vmatpush1.msra.mxu0 0.0
    %1371 = vmatprep.subr.mxu0 0.0
    %1372 = vmatpush1.msra.mxu0 0.0
    %1373 = vmatprep.subr.mxu0 0.0
    %1374 = vmatpush1.msra.mxu0 0.0
    %1375 = vmatprep.subr.mxu0 0.0
    %1376 = vmatpush1.msra.mxu0 0.0
    %1377 = vmatprep.subr.mxu0 0.0
    %1378 = vmatpush1.msra.mxu0 0.0
    %1379 = vmatprep.subr.mxu0 0.0
    %1380 = vmatpush1.msra.mxu0 0.0
    %1381 = vmatprep.subr.mxu0 0.0
    %1382 = vmatpush1.msra.mxu0 0.0
    %1383 = vmatprep.subr.mxu0 0.0
    %1384 = vmatpush1.msra.mxu0 0.0
    %1385 = vmatprep.subr.mxu0 0.0
    %1386 = vmatpush1.msra.mxu0 0.0
    %1387 = vmatprep.mubr.f32.mxu0 0.0
    %1388 = vmatmul.mubr.f32.gmra.mrb[0].mxu0 %v1318
    %v1389 = vpop.f32.mrb[0].mxu0
    %v1390 = vadd.f32 0.0, %v1389
    %v1391 = vpop.f32.mrb[0].mxu0
    %1392 = vmatprep.mubr.f32.mxu0 0.0
    %1393 = vmatmul.mubr.f32.gmra.mrb[0].mxu0 %v1321
    %v1394 = vpop.f32.mrb[0].mxu0
    %v1395 = vadd.f32 0.0, %v1394
    %v1396 = vpop.f32.mrb[0].mxu0
    %1397 = vdwg.mxu0
    %v1398 = vadd.f32 %v984, %v1390
    %v1399 = vadd.f32 %v985, %v1395
    %1400 = vrot.lane.b32.xlu0 %v132, 104
    %v1401 = vpop.permute.xlu0 %1400
    %1402 = vrot.lane.b32.xlu0 %v132, 72
    %v1403 = vpop.permute.xlu0 %1402
    %v1404 = vsel %vm162, %v1401, 0
    %v1406 = vsel %vm162, %v1403, 0
    %1408 = vmatprep.subr.mxu0 0.0
    %1409 = vmatpush1.xpose.msra.mxu0 %v1406
    %1410 = vmatprep.subr.mxu0 0.0
    %1411 = vmatpush1.xpose.msra.mxu0 0.0
    %1412 = vmatprep.subr.mxu0 0.0
    %1413 = vmatpush1.xpose.msra.mxu0 0.0
    %1414 = vmatprep.subr.mxu0 0.0
    %1415 = vmatpush1.xpose.msra.mxu0 0.0
    %1416 = vmatprep.subr.mxu0 0.0
    %1417 = vmatpush1.xpose.msra.mxu0 0.0
    %1418 = vmatprep.subr.mxu0 0.0
    %1419 = vmatpush1.xpose.msra.mxu0 0.0
    %1420 = vmatprep.subr.mxu0 0.0
    %1421 = vmatpush1.xpose.msra.mxu0 0.0
    %1422 = vmatprep.subr.mxu0 0.0
    %1423 = vmatpush1.xpose.msra.mxu0 0.0
    %1424 = vmatprep.subr.mxu0 0.0
    %1425 = vmatpush1.xpose.msra.mxu0 0.0
    %1426 = vmatprep.subr.mxu0 0.0
    %1427 = vmatpush1.xpose.msra.mxu0 0.0
    %1428 = vmatprep.subr.mxu0 0.0
    %1429 = vmatpush1.xpose.msra.mxu0 0.0
    %1430 = vmatprep.subr.mxu0 0.0
    %1431 = vmatpush1.xpose.msra.mxu0 0.0
    %1432 = vmatprep.subr.mxu0 0.0
    %1433 = vmatpush1.xpose.msra.mxu0 0.0
    %1434 = vmatprep.subr.mxu0 0.0
    %1435 = vmatpush1.xpose.msra.mxu0 0.0
    %1436 = vmatprep.subr.mxu0 0.0
    %1437 = vmatpush1.xpose.msra.mxu0 0.0
    %1438 = vmatprep.subr.mxu0 0.0
    %1439 = vmatpush1.xpose.msra.mxu0 0.0
    %1440 = vmatprep.subr.mxu0 0.0
    %1441 = vmatpush1.xpose.msra.mxu0 0.0
    %1442 = vmatprep.subr.mxu0 0.0
    %1443 = vmatpush1.xpose.msra.mxu0 0.0
    %1444 = vmatprep.subr.mxu0 0.0
    %1445 = vmatpush1.xpose.msra.mxu0 0.0
    %1446 = vmatprep.subr.mxu0 0.0
    %1447 = vmatpush1.xpose.msra.mxu0 0.0
    %1448 = vmatprep.subr.mxu0 0.0
    %1449 = vmatpush1.xpose.msra.mxu0 0.0
    %1450 = vmatprep.subr.mxu0 0.0
    %1451 = vmatpush1.xpose.msra.mxu0 0.0
    %1452 = vmatprep.subr.mxu0 0.0
    %1453 = vmatpush1.xpose.msra.mxu0 0.0
    %1454 = vmatprep.subr.mxu0 0.0
    %1455 = vmatpush1.xpose.msra.mxu0 0.0
    %1456 = vmatprep.subr.mxu0 0.0
    %1457 = vmatpush1.xpose.msra.mxu0 0.0
    %1458 = vmatprep.subr.mxu0 0.0
    %1459 = vmatpush1.xpose.msra.mxu0 0.0
    %1460 = vmatprep.subr.mxu0 0.0
    %1461 = vmatpush1.xpose.msra.mxu0 0.0
    %1462 = vmatprep.subr.mxu0 0.0
    %1463 = vmatpush1.xpose.msra.mxu0 0.0
    %1464 = vmatprep.subr.mxu0 0.0
    %1465 = vmatpush1.xpose.msra.mxu0 0.0
    %1466 = vmatprep.subr.mxu0 0.0
    %1467 = vmatpush1.xpose.msra.mxu0 0.0
    %1468 = vmatprep.subr.mxu0 0.0
    %1469 = vmatpush1.xpose.msra.mxu0 0.0
    %1470 = vmatprep.subr.mxu0 0.0
    %1471 = vmatpush1.xpose.msra.mxu0 0.0
    %1472 = vmatprep.mubr.f32.mxu0 0.0
    %1473 = vmatmul.mubr.f32.gmra.mrb[0].mxu0 %v1404
    %v1474 = vpop.f32.mrb[0].mxu0
    %v1475 = vadd.f32 %v152, %v1474
    %v1476 = vpop.f32.mrb[0].mxu0
    %1477 = vdwg.mxu0
    %1478 = vrot.lane.b32.xlu0 %v137, 104
    %v1479 = vpop.permute.xlu0 %1478
    %1480 = vrot.lane.b32.xlu0 %v137, 72
    %v1481 = vpop.permute.xlu0 %1480
    %v1482 = vsel %vm162, %v1479, 0
    %v1484 = vsel %vm162, %v1481, 0
    %1486 = vmatprep.subr.mxu0 0.0
    %1487 = vmatpush1.xpose.msra.mxu0 %v1484
    %1488 = vmatprep.subr.mxu0 0.0
    %1489 = vmatpush1.xpose.msra.mxu0 0.0
    %1490 = vmatprep.subr.mxu0 0.0
    %1491 = vmatpush1.xpose.msra.mxu0 0.0
    %1492 = vmatprep.subr.mxu0 0.0
    %1493 = vmatpush1.xpose.msra.mxu0 0.0
    %1494 = vmatprep.subr.mxu0 0.0
    %1495 = vmatpush1.xpose.msra.mxu0 0.0
    %1496 = vmatprep.subr.mxu0 0.0
    %1497 = vmatpush1.xpose.msra.mxu0 0.0
    %1498 = vmatprep.subr.mxu0 0.0
    %1499 = vmatpush1.xpose.msra.mxu0 0.0
    %1500 = vmatprep.subr.mxu0 0.0
    %1501 = vmatpush1.xpose.msra.mxu0 0.0
    %1502 = vmatprep.subr.mxu0 0.0
    %1503 = vmatpush1.xpose.msra.mxu0 0.0
    %1504 = vmatprep.subr.mxu0 0.0
    %1505 = vmatpush1.xpose.msra.mxu0 0.0
    %1506 = vmatprep.subr.mxu0 0.0
    %1507 = vmatpush1.xpose.msra.mxu0 0.0
    %1508 = vmatprep.subr.mxu0 0.0
    %1509 = vmatpush1.xpose.msra.mxu0 0.0
    %1510 = vmatprep.subr.mxu0 0.0
    %1511 = vmatpush1.xpose.msra.mxu0 0.0
    %1512 = vmatprep.subr.mxu0 0.0
    %1513 = vmatpush1.xpose.msra.mxu0 0.0
    %1514 = vmatprep.subr.mxu0 0.0
    %1515 = vmatpush1.xpose.msra.mxu0 0.0
    %1516 = vmatprep.subr.mxu0 0.0
    %1517 = vmatpush1.xpose.msra.mxu0 0.0
    %1518 = vmatprep.subr.mxu0 0.0
    %1519 = vmatpush1.xpose.msra.mxu0 0.0
    %1520 = vmatprep.subr.mxu0 0.0
    %1521 = vmatpush1.xpose.msra.mxu0 0.0
    %1522 = vmatprep.subr.mxu0 0.0
    %1523 = vmatpush1.xpose.msra.mxu0 0.0
    %1524 = vmatprep.subr.mxu0 0.0
    %1525 = vmatpush1.xpose.msra.mxu0 0.0
    %1526 = vmatprep.subr.mxu0 0.0
    %1527 = vmatpush1.xpose.msra.mxu0 0.0
    %1528 = vmatprep.subr.mxu0 0.0
    %1529 = vmatpush1.xpose.msra.mxu0 0.0
    %1530 = vmatprep.subr.mxu0 0.0
    %1531 = vmatpush1.xpose.msra.mxu0 0.0
    %1532 = vmatprep.subr.mxu0 0.0
    %1533 = vmatpush1.xpose.msra.mxu0 0.0
    %1534 = vmatprep.subr.mxu0 0.0
    %1535 = vmatpush1.xpose.msra.mxu0 0.0
    %1536 = vmatprep.subr.mxu0 0.0
    %1537 = vmatpush1.xpose.msra.mxu0 0.0
    %1538 = vmatprep.subr.mxu0 0.0
    %1539 = vmatpush1.xpose.msra.mxu0 0.0
    %1540 = vmatprep.subr.mxu0 0.0
    %1541 = vmatpush1.xpose.msra.mxu0 0.0
    %1542 = vmatprep.subr.mxu0 0.0
    %1543 = vmatpush1.xpose.msra.mxu0 0.0
    %1544 = vmatprep.subr.mxu0 0.0
    %1545 = vmatpush1.xpose.msra.mxu0 0.0
    %1546 = vmatprep.subr.mxu0 0.0
    %1547 = vmatpush1.xpose.msra.mxu0 0.0
    %1548 = vmatprep.subr.mxu0 0.0
    %1549 = vmatpush1.xpose.msra.mxu0 0.0
    %1550 = vmatprep.mubr.f32.mxu0 0.0
    %1551 = vmatmul.mubr.f32.gmra.mrb[0].mxu0 %v1482
    %v1552 = vpop.f32.mrb[0].mxu0
    %v1553 = vadd.f32 %v156, %v1552
    %v1554 = vpop.f32.mrb[0].mxu0
    %1555 = vdwg.mxu0
    %v1556 = vsel %vm162, %v1475, -inf
    %1557 = vmax.xlane.f32.xlu0 %v1556
    %v1558 = vpop.xlane.xlu0 %1557
    %v1559 = vsel %vm162, %v1553, -inf
    %1560 = vmax.xlane.f32.xlu0 %v1559
    %v1561 = vpop.xlane.xlu0 %1560
    %v1562 = vsub.f32 %v1475, %v1558
    %v1563 = vsub.f32 %v1553, %v1561
    %v1564 = vmul.f32 %v1562, 1.442695
    %v1565 = vpow.pop %v1564
    %v1566 = vmul.f32 %v1563, 1.442695
    %v1567 = vpow.pop %v1566
    %v1568 = vsel %vm162, %v1565, 0.0
    %1569 = vadd.xlane.f32.xlu0 %v1568
    %v1570 = vpop.xlane.xlu0 %1569
    %v1571 = vsel %vm162, %v1567, 0.0
    %1572 = vadd.xlane.f32.xlu0 %v1571
    %v1573 = vpop.xlane.xlu0 %1572
    %v1574 = vrcp.pop %v1570
    %v1575 = vrcp.pop %v1573
    %v1576 = vmul.f32 %v1565, %v1574
    %v1577 = vmul.f32 %v1567, %v1575
    %1578 = vrot.lane.b32.xlu0 %v132, 40
    %v1579 = vpop.permute.xlu0 %1578
    %v1582 = vsel %vm162, %v1576, 0
    %1584 = vmatprep.subr.mxu0 0.0
    %1585 = vmatpush1.msra.mxu0 %v1579
    %1586 = vmatprep.subr.mxu0 0.0
    %1587 = vmatpush1.msra.mxu0 0.0
    %1588 = vmatprep.subr.mxu0 0.0
    %1589 = vmatpush1.msra.mxu0 0.0
    %1590 = vmatprep.subr.mxu0 0.0
    %1591 = vmatpush1.msra.mxu0 0.0
    %1592 = vmatprep.subr.mxu0 0.0
    %1593 = vmatpush1.msra.mxu0 0.0
    %1594 = vmatprep.subr.mxu0 0.0
    %1595 = vmatpush1.msra.mxu0 0.0
    %1596 = vmatprep.subr.mxu0 0.0
    %1597 = vmatpush1.msra.mxu0 0.0
    %1598 = vmatprep.subr.mxu0 0.0
    %1599 = vmatpush1.msra.mxu0 0.0
    %1600 = vmatprep.subr.mxu0 0.0
    %1601 = vmatpush1.msra.mxu0 0.0
    %1602 = vmatprep.subr.mxu0 0.0
    %1603 = vmatpush1.msra.mxu0 0.0
    %1604 = vmatprep.subr.mxu0 0.0
    %1605 = vmatpush1.msra.mxu0 0.0
    %1606 = vmatprep.subr.mxu0 0.0
    %1607 = vmatpush1.msra.mxu0 0.0
    %1608 = vmatprep.subr.mxu0 0.0
    %1609 = vmatpush1.msra.mxu0 0.0
    %1610 = vmatprep.subr.mxu0 0.0
    %1611 = vmatpush1.msra.mxu0 0.0
    %1612 = vmatprep.subr.mxu0 0.0
    %1613 = vmatpush1.msra.mxu0 0.0
    %1614 = vmatprep.subr.mxu0 0.0
    %1615 = vmatpush1.msra.mxu0 0.0
    %1616 = vmatprep.subr.mxu0 0.0
    %1617 = vmatpush1.msra.mxu0 0.0
    %1618 = vmatprep.subr.mxu0 0.0
    %1619 = vmatpush1.msra.mxu0 0.0
    %1620 = vmatprep.subr.mxu0 0.0
    %1621 = vmatpush1.msra.mxu0 0.0
    %1622 = vmatprep.subr.mxu0 0.0
    %1623 = vmatpush1.msra.mxu0 0.0
    %1624 = vmatprep.subr.mxu0 0.0
    %1625 = vmatpush1.msra.mxu0 0.0
    %1626 = vmatprep.subr.mxu0 0.0
    %1627 = vmatpush1.msra.mxu0 0.0
    %1628 = vmatprep.subr.mxu0 0.0
    %1629 = vmatpush1.msra.mxu0 0.0
    %1630 = vmatprep.subr.mxu0 0.0
    %1631 = vmatpush1.msra.mxu0 0.0
    %1632 = vmatprep.subr.mxu0 0.0
    %1633 = vmatpush1.msra.mxu0 0.0
    %1634 = vmatprep.subr.mxu0 0.0
    %1635 = vmatpush1.msra.mxu0 0.0
    %1636 = vmatprep.subr.mxu0 0.0
    %1637 = vmatpush1.msra.mxu0 0.0
    %1638 = vmatprep.subr.mxu0 0.0
    %1639 = vmatpush1.msra.mxu0 0.0
    %1640 = vmatprep.subr.mxu0 0.0
    %1641 = vmatpush1.msra.mxu0 0.0
    %1642 = vmatprep.subr.mxu0 0.0
    %1643 = vmatpush1.msra.mxu0 0.0
    %1644 = vmatprep.subr.mxu0 0.0
    %1645 = vmatpush1.msra.mxu0 0.0
    %1646 = vmatprep.subr.mxu0 0.0
    %1647 = vmatpush1.msra.mxu0 0.0
    %1648 = vmatprep.mubr.f32.mxu0 0.0
    %1649 = vmatmul.mubr.f32.gmra.mrb[0].mxu0 %v1582
    %v1650 = vpop.f32.mrb[0].mxu0
    %v1651 = vadd.f32 0.0, %v1650
    %v1652 = vpop.f32.mrb[0].mxu0
    %1653 = vdwg.mxu0
    %1654 = vrot.lane.b32.xlu0 %v137, 40
    %v1655 = vpop.permute.xlu0 %1654
    %v1658 = vsel %vm162, %v1577, 0
    %1660 = vmatprep.subr.mxu0 0.0
    %1661 = vmatpush1.msra.mxu0 %v1655
    %1662 = vmatprep.subr.mxu0 0.0
    %1663 = vmatpush1.msra.mxu0 0.0
    %1664 = vmatprep.subr.mxu0 0.0
    %1665 = vmatpush1.msra.mxu0 0.0
    %1666 = vmatprep.subr.mxu0 0.0
    %1667 = vmatpush1.msra.mxu0 0.0
    %1668 = vmatprep.subr.mxu0 0.0
    %1669 = vmatpush1.msra.mxu0 0.0
    %1670 = vmatprep.subr.mxu0 0.0
    %1671 = vmatpush1.msra.mxu0 0.0
    %1672 = vmatprep.subr.mxu0 0.0
    %1673 = vmatpush1.msra.mxu0 0.0
    %1674 = vmatprep.subr.mxu0 0.0
    %1675 = vmatpush1.msra.mxu0 0.0
    %1676 = vmatprep.subr.mxu0 0.0
    %1677 = vmatpush1.msra.mxu0 0.0
    %1678 = vmatprep.subr.mxu0 0.0
    %1679 = vmatpush1.msra.mxu0 0.0
    %1680 = vmatprep.subr.mxu0 0.0
    %1681 = vmatpush1.msra.mxu0 0.0
    %1682 = vmatprep.subr.mxu0 0.0
    %1683 = vmatpush1.msra.mxu0 0.0
    %1684 = vmatprep.subr.mxu0 0.0
    %1685 = vmatpush1.msra.mxu0 0.0
    %1686 = vmatprep.subr.mxu0 0.0
    %1687 = vmatpush1.msra.mxu0 0.0
    %1688 = vmatprep.subr.mxu0 0.0
    %1689 = vmatpush1.msra.mxu0 0.0
    %1690 = vmatprep.subr.mxu0 0.0
    %1691 = vmatpush1.msra.mxu0 0.0
    %1692 = vmatprep.subr.mxu0 0.0
    %1693 = vmatpush1.msra.mxu0 0.0
    %1694 = vmatprep.subr.mxu0 0.0
    %1695 = vmatpush1.msra.mxu0 0.0
    %1696 = vmatprep.subr.mxu0 0.0
    %1697 = vmatpush1.msra.mxu0 0.0
    %1698 = vmatprep.subr.mxu0 0.0
    %1699 = vmatpush1.msra.mxu0 0.0
    %1700 = vmatprep.subr.mxu0 0.0
    %1701 = vmatpush1.msra.mxu0 0.0
    %1702 = vmatprep.subr.mxu0 0.0
    %1703 = vmatpush1.msra.mxu0 0.0
    %1704 = vmatprep.subr.mxu0 0.0
    %1705 = vmatpush1.msra.mxu0 0.0
    %1706 = vmatprep.subr.mxu0 0.0
    %1707 = vmatpush1.msra.mxu0 0.0
    %1708 = vmatprep.subr.mxu0 0.0
    %1709 = vmatpush1.msra.mxu0 0.0
    %1710 = vmatprep.subr.mxu0 0.0
    %1711 = vmatpush1.msra.mxu0 0.0
    %1712 = vmatprep.subr.mxu0 0.0
    %1713 = vmatpush1.msra.mxu0 0.0
    %1714 = vmatprep.subr.mxu0 0.0
    %1715 = vmatpush1.msra.mxu0 0.0
    %1716 = vmatprep.subr.mxu0 0.0
    %1717 = vmatpush1.msra.mxu0 0.0
    %1718 = vmatprep.subr.mxu0 0.0
    %1719 = vmatpush1.msra.mxu0 0.0
    %1720 = vmatprep.subr.mxu0 0.0
    %1721 = vmatpush1.msra.mxu0 0.0
    %1722 = vmatprep.subr.mxu0 0.0
    %1723 = vmatpush1.msra.mxu0 0.0
    %1724 = vmatprep.mubr.f32.mxu0 0.0
    %1725 = vmatmul.mubr.f32.gmra.mrb[0].mxu0 %v1658
    %v1726 = vpop.f32.mrb[0].mxu0
    %v1727 = vadd.f32 0.0, %v1726
    %v1728 = vpop.f32.mrb[0].mxu0
    %1729 = vdwg.mxu0
    %v1730 = vld [vmem:[%s3 + $0x18] sm:$0xff]
    %v1732 = vsel %vm162, %v1651, 0
    %v1735 = vsel %vm162, %v1727, 0
    %1737 = vmatprep.subr.mxu0 0.0
    %1738 = vmatpush1.msra.mxu0 %v1730
    %1739 = vmatprep.subr.mxu0 0.0
    %1740 = vmatpush1.msra.mxu0 0.0
    %1741 = vmatprep.subr.mxu0 0.0
    %1742 = vmatpush1.msra.mxu0 0.0
    %1743 = vmatprep.subr.mxu0 0.0
    %1744 = vmatpush1.msra.mxu0 0.0
    %1745 = vmatprep.subr.mxu0 0.0
    %1746 = vmatpush1.msra.mxu0 0.0
    %1747 = vmatprep.subr.mxu0 0.0
    %1748 = vmatpush1.msra.mxu0 0.0
    %1749 = vmatprep.subr.mxu0 0.0
    %1750 = vmatpush1.msra.mxu0 0.0
    %1751 = vmatprep.subr.mxu0 0.0
    %1752 = vmatpush1.msra.mxu0 0.0
    %1753 = vmatprep.subr.mxu0 0.0
    %1754 = vmatpush1.msra.mxu0 0.0
    %1755 = vmatprep.subr.mxu0 0.0
    %1756 = vmatpush1.msra.mxu0 0.0
    %1757 = vmatprep.subr.mxu0 0.0
    %1758 = vmatpush1.msra.mxu0 0.0
    %1759 = vmatprep.subr.mxu0 0.0
    %1760 = vmatpush1.msra.mxu0 0.0
    %1761 = vmatprep.subr.mxu0 0.0
    %1762 = vmatpush1.msra.mxu0 0.0
    %1763 = vmatprep.subr.mxu0 0.0
    %1764 = vmatpush1.msra.mxu0 0.0
    %1765 = vmatprep.subr.mxu0 0.0
    %1766 = vmatpush1.msra.mxu0 0.0
    %1767 = vmatprep.subr.mxu0 0.0
    %1768 = vmatpush1.msra.mxu0 0.0
    %1769 = vmatprep.subr.mxu0 0.0
    %1770 = vmatpush1.msra.mxu0 0.0
    %1771 = vmatprep.subr.mxu0 0.0
    %1772 = vmatpush1.msra.mxu0 0.0
    %1773 = vmatprep.subr.mxu0 0.0
    %1774 = vmatpush1.msra.mxu0 0.0
    %1775 = vmatprep.subr.mxu0 0.0
    %1776 = vmatpush1.msra.mxu0 0.0
    %1777 = vmatprep.subr.mxu0 0.0
    %1778 = vmatpush1.msra.mxu0 0.0
    %1779 = vmatprep.subr.mxu0 0.0
    %1780 = vmatpush1.msra.mxu0 0.0
    %1781 = vmatprep.subr.mxu0 0.0
    %1782 = vmatpush1.msra.mxu0 0.0
    %1783 = vmatprep.subr.mxu0 0.0
    %1784 = vmatpush1.msra.mxu0 0.0
    %1785 = vmatprep.subr.mxu0 0.0
    %1786 = vmatpush1.msra.mxu0 0.0
    %1787 = vmatprep.subr.mxu0 0.0
    %1788 = vmatpush1.msra.mxu0 0.0
    %1789 = vmatprep.subr.mxu0 0.0
    %1790 = vmatpush1.msra.mxu0 0.0
    %1791 = vmatprep.subr.mxu0 0.0
    %1792 = vmatpush1.msra.mxu0 0.0
    %1793 = vmatprep.subr.mxu0 0.0
    %1794 = vmatpush1.msra.mxu0 0.0
    %1795 = vmatprep.subr.mxu0 0.0
    %1796 = vmatpush1.msra.mxu0 0.0
    %1797 = vmatprep.subr.mxu0 0.0
    %1798 = vmatpush1.msra.mxu0 0.0
    %1799 = vmatprep.subr.mxu0 0.0
    %1800 = vmatpush1.msra.mxu0 0.0
    %1801 = vmatprep.mubr.f32.mxu0 0.0
    %1802 = vmatmul.mubr.f32.gmra.mrb[0].mxu0 %v1732
    %v1803 = vpop.f32.mrb[0].mxu0
    %v1804 = vadd.f32 0.0, %v1803
    %v1805 = vpop.f32.mrb[0].mxu0
    %1806 = vmatprep.mubr.f32.mxu0 0.0
    %1807 = vmatmul.mubr.f32.gmra.mrb[0].mxu0 %v1735
    %v1808 = vpop.f32.mrb[0].mxu0
    %v1809 = vadd.f32 0.0, %v1808
    %v1810 = vpop.f32.mrb[0].mxu0
    %1811 = vdwg.mxu0
    %v1812 = vadd.f32 %v1398, %v1804
    %v1813 = vadd.f32 %v1399, %v1809
    %1814 = vst.msk [vmem:[#allocation4] sm:$0xff] %vm162, %v334
    %1815 = vst.msk [vmem:[#allocation4 + $0x8] sm:$0xff] %vm162, %v748
    %1816 = vst.msk [vmem:[#allocation4 + $0x10] sm:$0xff] %vm162, %v1162
    %1817 = vst.msk [vmem:[#allocation4 + $0x18] sm:$0xff] %vm162, %v1576
    %1818 = vst.msk [vmem:[#allocation4 + $0x20] sm:$0xff] %vm162, %v335
    %1819 = vst.msk [vmem:[#allocation4 + $0x28] sm:$0xff] %vm162, %v749
    %1820 = vst.msk [vmem:[#allocation4 + $0x30] sm:$0xff] %vm162, %v1163
    %1821 = vst.msk [vmem:[#allocation4 + $0x38] sm:$0xff] %vm162, %v1577
    %v1822 = vsel %vm58, %v1812, 0.0
    %1823 = vadd.xlane.f32.xlu0 %v1822
    %v1824 = vpop.xlane.xlu0 %1823
    %v1825 = vsel %vm58, %v1813, 0.0
    %1826 = vadd.xlane.f32.xlu0 %v1825
    %v1827 = vpop.xlane.xlu0 %1826
    %v1828 = vrcp.pop 32.0
    %v1829 = vmul.f32 %v1824, %v1828
    %v1830 = vmul.f32 %v1827, %v1828
    %v1831 = vsub.f32 %v1812, %v1829
    %v1832 = vsub.f32 %v1813, %v1830
    %v1833 = vmul.f32 %v1831, %v1831
    %v1834 = vmul.f32 %v1832, %v1832
    %v1835 = vsel %vm58, %v1833, 0.0
    %1836 = vadd.xlane.f32.xlu0 %v1835
    %v1837 = vpop.xlane.xlu0 %1836
    %v1838 = vsel %vm58, %v1834, 0.0
    %1839 = vadd.xlane.f32.xlu0 %v1838
    %v1840 = vpop.xlane.xlu0 %1839
    %v1841 = vmul.f32 %v1837, %v1828
    %v1842 = vmul.f32 %v1840, %v1828
    %v1843 = vadd.f32 %v1841, 1e-12
    %v1844 = vadd.f32 %v1842, 1e-12
    %v1845 = vrsqrt.pop %v1843
    %v1846 = vrsqrt.pop %v1844
    %v1847 = vmul.f32 %v1831, %v1845
    %v1848 = vmul.f32 %v1832, %v1846
    %v1849 = vlaneseq
    %v1850 = vshrl.u32 %v1849, 7
    %v1851 = vsub.s32 0, %v1850
    %v1852 = vrot.slane %v141, %v1851
    %v1853 = vmul.f32 %v1847, %v1852
    %v1854 = vmul.f32 %v1848, %v1852
    %v1855 = vlaneseq
    %v1856 = vshrl.u32 %v1855, 7
    %v1857 = vsub.s32 0, %v1856
    %v1858 = vrot.slane %v142, %v1857
    %v1859 = vadd.f32 %v1853, %v1858
    %v1860 = vadd.f32 %v1854, %v1858
    %1861 = vst.msk [vmem:[#allocation2] sm:$0xff] %vm58, %v1859
    %1862 = vst.msk [vmem:[#allocation2 + $0x8] sm:$0xff] %vm58, %v1860
    // Predicated region
    $region18: #{custom_bert_attention.1} parent=1 // pred_check
      _
    $region19: #{custom_bert_attention.1} parent=1 // pred_check_branch
      %1864 = sbr.rel (0) target = $region21
    $region20: #{custom_bert_attention.1} parent=1 // pred_region
      %s1866 = ssub.s32 256, 256
      %1867 = vsyncadd [#allocation3], %s1866
      %s1868 = sshll.u32 [#allocation2], 4
      %s1869 = int_to_ptr.vmem [resolvable:$true] %s1868
      %1874 = dma.vmem_to_hbm [thread:$0]  %s1869, 256, %s4, [#allocation3], 128, 128, 8
    $region21: #{custom_bert_attention.1} parent=1 // pred_fallthru
      _
    // Predicated region
    $region22: #{custom_bert_attention.1} parent=1 // pred_check
      _
    $region23: #{custom_bert_attention.1} parent=1 // pred_check_branch
      %1876 = sbr.rel (0) target = $region25
    $region24: #{custom_bert_attention.1} parent=1 // pred_region
      %s1878 = ssub.s32 1024, 1024
      %1879 = vsyncadd [#allocation5], %s1878
      %s1880 = sshll.u32 [#allocation4], 4
      %s1881 = int_to_ptr.vmem [resolvable:$true] %s1880
      %1886 = dma.vmem_to_hbm [thread:$0]  %s1881, 1024, %s5, [#allocation5], 128, 128, 8
    $region25: #{custom_bert_attention.1} parent=1 // pred_fallthru
      _
    // Predicated region
    $region26: #{custom_bert_attention.1} parent=1 // pred_check
      _
    $region27: #{custom_bert_attention.1} parent=1 // pred_check_branch
      %1888 = sbr.rel (0) target = $region29
    $region28: #{custom_bert_attention.1} parent=1 // pred_region
      %1889 = dma.done [#allocation3], 256
    $region29: #{custom_bert_attention.1} parent=1 // pred_fallthru
      _
    // Predicated region
    $region30: #{custom_bert_attention.1} parent=1 // pred_check
      _
    $region31: #{custom_bert_attention.1} parent=1 // pred_check_branch
      %1891 = sbr.rel (0) target = $region33
    $region32: #{custom_bert_attention.1} parent=1 // pred_region
      %1892 = dma.done [#allocation5], 1024
    $region33: #{custom_bert_attention.1} parent=1 // pred_fallthru
      _
    %1893 = vsyncpa [#allocation3], 1
    %1894 = vsyncpa [#allocation5], 1

</llo_original>
